<compile_context>
chip_gen: v5e
topology: v5e:2x2
jax: 0.10.0
libtpu: 0.0.40
codegen_flags: <defaults>
</compile_context>

<pallas_src>
import functools

import jax
import jax.numpy as jnp
from jax.experimental import pallas as pl
from jax.experimental.pallas import tpu as pltpu


CPAD = 128        # lane-padded feature width for XW1 / H / HW2 / Y
PAD_UNIT = 512    # node-count padding unit -> tk >= 512, even row-tile count
TM = 256          # row tile (accumulator / output tile height)


def _round_up(x, m):
    return (x + m - 1) // m * m


def padded_size(n):
    return _round_up(max(n, 1), PAD_UNIT)


def _pick_tk(n_pad):
    # largest contiguous A column-tile that divides n_pad (n_pad % 512 == 0)
    for t in (2048, 1024, 512):
        if n_pad % t == 0:
            return t
    return 512


def _vmem_capacity_bytes():
    try:
        info = pltpu.get_tpu_info()
        for attr in ("vmem_capacity_bytes", "vmem_size_bytes", "vmem_bytes"):
            v = getattr(info, attr, None)
            if v:
                return int(v)
    except Exception:
        pass
    return 64 << 20   # conservative default (v7x per-TC VMEM)


# --------------------------------------------------------------------------
# Fused path: whole bf16 A_hat resident in VMEM, read from HBM exactly once.
# --------------------------------------------------------------------------
def _gcn_fused_kernel(a_hbm, xw1_ref, b1_ref, w2_ref, b2_ref, o_ref,
                      a_vmem, hw2_ref, copy_sem, *, tm):
    p = pl.program_id(0)   # phase: 0 -> HW2 = relu(A@XW1+b1)@W2, 1 -> Y = A@HW2+b2
    r = pl.program_id(1)   # row tile

    @pl.when(jnp.logical_and(p == 0, r == 0))
    def _load_a_once():
        cp = pltpu.make_async_copy(a_hbm, a_vmem, copy_sem)
        cp.start()
        cp.wait()

    row = pl.multiple_of(r * tm, tm)
    a_rows = a_vmem[pl.ds(row, tm), :]                  # (tm, n_pad) bf16

    @pl.when(p == 0)
    def _pass1():
        h = jnp.dot(a_rows, xw1_ref[...], preferred_element_type=jnp.float32)
        h = jnp.maximum(h + b1_ref[...], 0.0)
        hw2 = jnp.dot(h.astype(w2_ref.dtype), w2_ref[...],
                      preferred_element_type=jnp.float32)
        hw2_ref[pl.ds(row, tm), :] = hw2.astype(hw2_ref.dtype)
        o_ref[...] = jnp.zeros_like(o_ref)              # keep writeback defined

    @pl.when(p == 1)
    def _pass2():
        y = jnp.dot(a_rows, hw2_ref[...], preferred_element_type=jnp.float32)
        o_ref[...] = (y + b2_ref[...]).astype(o_ref.dtype)


def _fused_vmem_need(n_pad):
    return (n_pad * n_pad * 2              # resident A scratch (bf16)
            + n_pad * CPAD * 2             # HW2 scratch (bf16)
            + 2 * n_pad * CPAD * 2         # XW1 resident input (2 buffers)
            + 2 * TM * CPAD * 4            # output tile double buffer (f32)
            + 2 * (CPAD * CPAD * 2 + 2 * CPAD * 4)   # W2 + biases
            + (2 << 20))                   # compiler-internal headroom


def _gcn_fused(a_bf16, xw1_p, b1_p, w2_p, b2_p, *, vmem_cap):
    n_pad = a_bf16.shape[0]
    grid = (2, n_pad // TM)

    need = _fused_vmem_need(n_pad)
    vmem_bytes = int(min(max(need + (6 << 20), 32 << 20),
                         max(vmem_cap - (2 << 20), 16 << 20)))

    flops = 2 * (2 * n_pad * n_pad * CPAD) + 2 * n_pad * CPAD * CPAD
    bytes_accessed = int(n_pad * n_pad * 2            # A read once
                         + n_pad * CPAD * 2           # XW1
                         + n_pad * CPAD * 4           # Y
                         + CPAD * CPAD * 2 + 2 * CPAD * 4)

    kernel = functools.partial(_gcn_fused_kernel, tm=TM)
    return pl.pallas_call(
        kernel,
        out_shape=jax.ShapeDtypeStruct((n_pad, CPAD), jnp.float32),
        grid_spec=pltpu.PrefetchScalarGridSpec(
            num_scalar_prefetch=0,
            grid=grid,
            in_specs=[
                pl.BlockSpec(memory_space=pl.ANY),                     # A (HBM)
                pl.BlockSpec((n_pad, CPAD), lambda p, r: (0, 0)),      # XW1
                pl.BlockSpec((1, CPAD), lambda p, r: (0, 0)),          # b1
                pl.BlockSpec((CPAD, CPAD), lambda p, r: (0, 0)),       # W2
                pl.BlockSpec((1, CPAD), lambda p, r: (0, 0)),          # b2
            ],
            out_specs=pl.BlockSpec((TM, CPAD), lambda p, r: (r, 0)),
            scratch_shapes=[
                pltpu.VMEM((n_pad, n_pad), jnp.bfloat16),   # resident A
                pltpu.VMEM((n_pad, CPAD), jnp.bfloat16),    # HW2 intermediate
                pltpu.SemaphoreType.DMA,
            ],
        ),
        compiler_params=pltpu.CompilerParams(
            dimension_semantics=("arbitrary", "arbitrary"),
            vmem_limit_bytes=vmem_bytes,
        ),
        cost_estimate=pl.CostEstimate(flops=flops, transcendentals=0,
                                      bytes_accessed=bytes_accessed),
    )(a_bf16, xw1_p, b1_p, w2_p, b2_p)


# --------------------------------------------------------------------------
# Streaming fallback: A streamed tile-by-tile, B fully VMEM resident.
# --------------------------------------------------------------------------
def _gcn_stream_kernel(a_ref, b_ref, bias_ref, *refs, apply_relu, project, tk):
    if project:
        w_ref, o_ref, acc_ref = refs
    else:
        w_ref = None
        o_ref, acc_ref = refs

    k = pl.program_id(1)

    @pl.when(k == 0)
    def _init():
        acc_ref[...] = jnp.zeros_like(acc_ref)

    koff = pl.multiple_of(k * tk, tk)
    acc_ref[...] += jnp.dot(a_ref[...], b_ref[pl.ds(koff, tk), :],
                            preferred_element_type=jnp.float32)

    @pl.when(k == pl.num_programs(1) - 1)
    def _finalize():
        y = acc_ref[...] + bias_ref[...]
        if apply_relu:
            y = jnp.maximum(y, 0.0)
        if project:
            y = jnp.dot(y.astype(w_ref.dtype), w_ref[...],
                        preferred_element_type=jnp.float32)
        o_ref[...] = y.astype(o_ref.dtype)


def _a_spmm_pass(a_bf16, b_bf16, bias_f32, w_bf16, *, apply_relu, out_dtype,
                 vmem_cap):
    """Tiled  out = post(A @ B + bias)  with A (n_pad,n_pad) bf16 streamed and
    B (n_pad, CPAD) bf16 fully VMEM resident (sliced along K in-kernel)."""
    n_pad = a_bf16.shape[0]
    tk = _pick_tk(n_pad)
    grid = (n_pad // TM, n_pad // tk)
    project = w_bf16 is not None

    in_specs = [
        pl.BlockSpec((TM, tk), lambda i, k: (i, k)),          # A tile (stream)
        pl.BlockSpec((n_pad, CPAD), lambda i, k: (0, 0)),     # B resident
        pl.BlockSpec((1, CPAD), lambda i, k: (0, 0)),         # bias resident
    ]
    args = [a_bf16, b_bf16, bias_f32]
    if project:
        in_specs.append(pl.BlockSpec((CPAD, CPAD), lambda i, k: (0, 0)))  # W2
        args.append(w_bf16)

    kernel = functools.partial(_gcn_stream_kernel, apply_relu=apply_relu,
                               project=project, tk=tk)

    out_itemsize = jnp.dtype(out_dtype).itemsize
    est = (2 * TM * tk * 2                 # A double-buffered
           + 2 * n_pad * CPAD * 2          # B resident (assume 2 buffers)
           + TM * CPAD * 4                 # accumulator
           + 2 * TM * CPAD * out_itemsize  # output double buffer
           + 2 * (CPAD * CPAD * 2 + 2 * CPAD * 4)
           + (4 << 20))
    vmem_bytes = int(min(max(est, 32 << 20),
                         max(vmem_cap - (2 << 20), 16 << 20)))

    flops = 2 * n_pad * n_pad * CPAD + (2 * n_pad * CPAD * CPAD if project else 0)
    bytes_accessed = int(n_pad * n_pad * 2 + n_pad * CPAD * 2
                         + n_pad * CPAD * out_itemsize + CPAD * CPAD * 2)

    return pl.pallas_call(
        kernel,
        out_shape=jax.ShapeDtypeStruct((n_pad, CPAD), out_dtype),
        grid_spec=pltpu.PrefetchScalarGridSpec(
            num_scalar_prefetch=0,
            grid=grid,
            in_specs=in_specs,
            out_specs=pl.BlockSpec((TM, CPAD), lambda i, k: (i, 0)),
            scratch_shapes=[pltpu.VMEM((TM, CPAD), jnp.float32)],
        ),
        compiler_params=pltpu.CompilerParams(
            dimension_semantics=("parallel", "arbitrary"),
            vmem_limit_bytes=vmem_bytes,
        ),
        cost_estimate=pl.CostEstimate(flops=flops, transcendentals=0,
                                      bytes_accessed=bytes_accessed),
    )(*args)


# --------------------------------------------------------------------------
# Wrapper
# --------------------------------------------------------------------------
def gcn_encoder_pallas(a_pad, x, w1, b1, w2, b2):
    """a_pad: normalized adjacency, ideally already (n_pad, n_pad) bf16."""
    n = x.shape[0]
    hidden = w1.shape[1]
    out_c = w2.shape[1]
    n_pad = padded_size(n)

    if a_pad.shape[0] != n_pad:
        # slow path: pad here (costs an extra pass over A) -- prefer building
        # A already padded via build_normalized_adjacency(..., n_pad).
        a_tmp = jnp.zeros((n_pad, n_pad), jnp.bfloat16)
        a_b = a_tmp.at[:a_pad.shape[0], :a_pad.shape[1]].set(
            a_pad.astype(jnp.bfloat16))
    else:
        a_b = a_pad.astype(jnp.bfloat16)   # no-op if already bf16

    # tiny wrapper-side glue (O(N*C)): hoisted X@W1, lane padding of features
    xw1 = (x @ w1).astype(jnp.bfloat16)
    xw1_p = jnp.zeros((n_pad, CPAD), jnp.bfloat16).at[:n, :hidden].set(xw1)
    b1_p = jnp.zeros((1, CPAD), jnp.float32).at[:, :hidden].set(
        jnp.reshape(b1, (1, hidden)).astype(jnp.float32))
    b2_p = jnp.zeros((1, CPAD), jnp.float32).at[:, :out_c].set(
        jnp.reshape(b2, (1, out_c)).astype(jnp.float32))
    w2_p = jnp.zeros((CPAD, CPAD), jnp.bfloat16).at[:hidden, :out_c].set(
        w2.astype(jnp.bfloat16))

    vmem_cap = _vmem_capacity_bytes()

    if _fused_vmem_need(n_pad) <= vmem_cap - (8 << 20):
        # A read from HBM once; both propagations run from VMEM-resident A.
        y = _gcn_fused(a_b, xw1_p, b1_p, w2_p, b2_p, vmem_cap=vmem_cap)
    else:
        # streaming two-pass fallback for graphs whose A doesn't fit VMEM
        hw2 = _a_spmm_pass(a_b, xw1_p, b1_p, w2_p, apply_relu=True,
                           out_dtype=jnp.bfloat16, vmem_cap=vmem_cap)
        y = _a_spmm_pass(a_b, hw2, b2_p, None, apply_relu=False,
                         out_dtype=jnp.float32, vmem_cap=vmem_cap)

    return y[:n, :out_c]


def build_normalized_adjacency(edge_index, num_nodes, n_pad=None):
    """Padded dense A_hat = D^-1/2 (A + I) D^-1/2 matching PyG gcn_norm
    defaults (add_self_loops=True, unit weights). Rows/cols >= num_nodes are
    zero, so padding never leaks into the propagation."""
    # TODO(synk): sparse scatter-add -> dense adjacency stays in plain JAX.
    if n_pad is None:
        n_pad = padded_size(num_nodes)
    src, dst = edge_index[0], edge_index[1]
    a = jnp.zeros((n_pad, n_pad), jnp.float32)
    a = a.at[dst, src].add(1.0)                               # row = target
    diag = jnp.arange(num_nodes)
    a = a.at[diag, diag].add(1.0)                             # self loops
    deg = a.sum(axis=1)
    dinv = jnp.where(deg > 0, 1.0 / jnp.sqrt(deg), 0.0)
    return dinv[:, None] * a * dinv[None, :]                  # f32, padded


def gcn_encoder_reference(a_hat, x, w1, b1, w2, b2):
    h = jnp.maximum(a_hat @ (x @ w1) + jnp.reshape(b1, (1, -1)), 0.0)
    return a_hat @ (h @ w2) + jnp.reshape(b2, (1, -1))


def gcn_encoder_reference_mixed(a_hat, x, w1, b1, w2, b2):
    """Emulates the kernel's bf16-operand / f32-accumulation numerics."""
    rt = lambda v: v.astype(jnp.bfloat16).astype(jnp.float32)
    a = rt(a_hat)
    xw1 = rt(x @ w1)
    h = jnp.maximum(a @ xw1 + jnp.reshape(b1, (1, -1)), 0.0)
    hw2 = rt(rt(h) @ rt(w2))
    return a @ hw2 + jnp.reshape(b2, (1, -1))


if __name__ == "__main__":
    key = jax.random.PRNGKey(0)

    num_nodes = 300          # not pad-aligned -> exercises padding path
    in_channels = 16
    out_channels = 8
    hidden = 2 * out_channels
    num_edges = 1200

    k_x, k_e, k_w1, k_b1, k_w2, k_b2 = jax.random.split(key, 6)

    x = jax.random.normal(k_x, (num_nodes, in_channels), dtype=jnp.float32)
    edge_index = jax.random.randint(k_e, (2, num_edges), 0, num_nodes,
                                    dtype=jnp.int32)
    w1 = (jax.random.normal(k_w1, (in_channels, hidden), dtype=jnp.float32)
          * (1.0 / jnp.sqrt(in_channels)))
    b1 = 0.1 * jax.random.normal(k_b1, (hidden,), dtype=jnp.float32)
    w2 = (jax.random.normal(k_w2, (hidden, out_channels), dtype=jnp.float32)
          * (1.0 / jnp.sqrt(hidden)))
    b2 = 0.1 * jax.random.normal(k_b2, (out_channels,), dtype=jnp.float32)

    # Build A_hat already padded; cast to bf16 ONCE, outside the forward jit.
    a_pad_f32 = build_normalized_adjacency(edge_index, num_nodes)
    a_pad_bf16 = a_pad_f32.astype(jnp.bfloat16)

    out = jax.jit(gcn_encoder_pallas)(a_pad_bf16, x, w1, b1, w2, b2)
    out = jax.block_until_ready(out)

    a_hat = a_pad_f32[:num_nodes, :num_nodes]
    ref_mixed = gcn_encoder_reference_mixed(a_hat, x, w1, b1, w2, b2)
    ref_f32 = gcn_encoder_reference(a_hat, x, w1, b1, w2, b2)

    assert out.shape == (num_nodes, out_channels)
    assert jnp.allclose(out, ref_mixed, atol=5e-3, rtol=5e-3), \
        "mismatch vs mixed-precision reference"
    assert jnp.allclose(out, ref_f32, atol=5e-2, rtol=5e-2), \
        "mismatch vs f32 reference"

    print("KERNEL_OK")
</pallas_src>

<mosaic_0001>
module attributes {stable_mosaic.version = 11 : i64} {
  func.func @_gcn_fused_kernel(%arg0: i32, %arg1: i32, %arg2: memref<512x512xbf16, #tpu.memory_space<any>>, %arg3: memref<512x128xbf16, #tpu.memory_space<vmem>>, %arg4: memref<1x128xf32, #tpu.memory_space<vmem>>, %arg5: memref<128x128xbf16, #tpu.memory_space<vmem>>, %arg6: memref<1x128xf32, #tpu.memory_space<vmem>>, %arg7: memref<256x128xf32, #tpu.memory_space<vmem>>, %arg8: memref<512x512xbf16, #tpu.memory_space<vmem>>, %arg9: memref<512x128xbf16, #tpu.memory_space<vmem>>, %arg10: memref<!tpu.dma_semaphore, #tpu.memory_space<semaphore_mem>>) attributes {dimension_semantics = [#tpu.dimension_semantics<arbitrary>, #tpu.dimension_semantics<arbitrary>], iteration_bounds = array<i64: 2, 2>, scalar_prefetch = 0 : i64, scratch_operands = 3 : i64, tpu.core_type = #tpu.core_type<tc>, window_params = [{}, {pipeline_mode = #tpu.pipeline_mode<synchronous>, transform_indices = @transform_1, window_bounds = array<i64: 512, 128>}, {pipeline_mode = #tpu.pipeline_mode<synchronous>, transform_indices = @transform_2, window_bounds = array<i64: 1, 128>}, {pipeline_mode = #tpu.pipeline_mode<synchronous>, transform_indices = @transform_3, window_bounds = array<i64: 128, 128>}, {pipeline_mode = #tpu.pipeline_mode<synchronous>, transform_indices = @transform_4, window_bounds = array<i64: 1, 128>}, {transform_indices = @transform_5, window_bounds = array<i64: 256, 128>}]} {
    %c0_i32 = arith.constant 0 : i32
    %0 = arith.cmpi eq, %arg0, %c0_i32 : i32
    %c0_i32_0 = arith.constant 0 : i32
    %1 = arith.cmpi eq, %arg1, %c0_i32_0 : i32
    %2 = arith.andi %0, %1 : i1
    %3 = arith.extui %2 : i1 to i32
    %c0_i32_1 = arith.constant 0 : i32
    %4 = arith.cmpi ne, %3, %c0_i32_1 : i32
    scf.if %4 {
      tpu.enqueue_dma source(%arg2 : memref<512x512xbf16, #tpu.memory_space<any>>) target(%arg8 : memref<512x512xbf16, #tpu.memory_space<vmem>>) target_semaphore(%arg10 : memref<!tpu.dma_semaphore, #tpu.memory_space<semaphore_mem>>)
      tpu.wait_dma2 semaphore(%arg10 : memref<!tpu.dma_semaphore, #tpu.memory_space<semaphore_mem>>) src(%arg2 : memref<512x512xbf16, #tpu.memory_space<any>>) dst(%arg8 : memref<512x512xbf16, #tpu.memory_space<vmem>>)
    } else {
    }
    %c256_i32 = arith.constant 256 : i32
    %5 = arith.muli %arg1, %c256_i32 : i32
    %6 = tpu.assume_multiple %5, 256 : i32
    %7 = arith.index_cast %6 : i32 to index
    %c0 = arith.constant 0 : index
    %8 = vector.load %arg8[%7, %c0] : memref<512x512xbf16, #tpu.memory_space<vmem>>, vector<256x512xbf16>
    %c0_i32_2 = arith.constant 0 : i32
    %9 = arith.cmpi eq, %arg0, %c0_i32_2 : i32
    %10 = arith.extui %9 : i1 to i32
    %c0_i32_3 = arith.constant 0 : i32
    %11 = arith.cmpi ne, %10, %c0_i32_3 : i32
    scf.if %11 {
      %c0_5 = arith.constant 0 : index
      %c0_6 = arith.constant 0 : index
      %15 = vector.load %arg3[%c0_5, %c0_6] : memref<512x128xbf16, #tpu.memory_space<vmem>>, vector<512x128xbf16>
      %cst = arith.constant dense<0.000000e+00> : vector<256x128xf32>
      %16 = tpu.matmul %8, %15, %cst {dimension_numbers = #tpu.dot_dimension_numbers<[1], [0], [0], [1], [0, 0, 1, 1], [], []>} : vector<256x512xbf16>, vector<512x128xbf16>, vector<256x128xf32> -> vector<256x128xf32>
      %c0_7 = arith.constant 0 : index
      %c0_8 = arith.constant 0 : index
      %17 = vector.load %arg4[%c0_7, %c0_8] : memref<1x128xf32, #tpu.memory_space<vmem>>, vector<1x128xf32>
      %18 = vector.broadcast %17 : vector<1x128xf32> to vector<256x128xf32>
      %19 = arith.addf %16, %18 : vector<256x128xf32>
      %cst_9 = arith.constant 0.000000e+00 : f32
      %20 = vector.broadcast %cst_9 : f32 to vector<256x128xf32>
      %21 = arith.maximumf %19, %20 : vector<256x128xf32>
      %22 = arith.truncf %21 : vector<256x128xf32> to vector<256x128xbf16>
      %c0_10 = arith.constant 0 : index
      %c0_11 = arith.constant 0 : index
      %23 = vector.load %arg5[%c0_10, %c0_11] : memref<128x128xbf16, #tpu.memory_space<vmem>>, vector<128x128xbf16>
      %cst_12 = arith.constant dense<0.000000e+00> : vector<256x128xf32>
      %24 = tpu.matmul %22, %23, %cst_12 {dimension_numbers = #tpu.dot_dimension_numbers<[1], [0], [0], [1], [0, 0, 1, 1], [], []>} : vector<256x128xbf16>, vector<128x128xbf16>, vector<256x128xf32> -> vector<256x128xf32>
      %25 = arith.truncf %24 : vector<256x128xf32> to vector<256x128xbf16>
      %26 = arith.index_cast %6 : i32 to index
      %c0_13 = arith.constant 0 : index
      %27 = vector.load %arg9[%26, %c0_13] : memref<512x128xbf16, #tpu.memory_space<vmem>>, vector<256x128xbf16>
      tpu.vector_store %arg9[%26, %c0_13], %25 {strides = array<i32>} : memref<512x128xbf16, #tpu.memory_space<vmem>>, vector<256x128xbf16>,
      %cst_14 = arith.constant 0.000000e+00 : f32
      %28 = vector.broadcast %cst_14 : f32 to vector<256x128xf32>
      %c0_15 = arith.constant 0 : index
      %c0_16 = arith.constant 0 : index
      %29 = vector.load %arg7[%c0_15, %c0_16] : memref<256x128xf32, #tpu.memory_space<vmem>>, vector<256x128xf32>
      tpu.vector_store %arg7[%c0_15, %c0_16], %28 {strides = array<i32>} : memref<256x128xf32, #tpu.memory_space<vmem>>, vector<256x128xf32>,
    } else {
    }
    %c1_i32 = arith.constant 1 : i32
    %12 = arith.cmpi eq, %arg0, %c1_i32 : i32
    %13 = arith.extui %12 : i1 to i32
    %c0_i32_4 = arith.constant 0 : i32
    %14 = arith.cmpi ne, %13, %c0_i32_4 : i32
    scf.if %14 {
      %c0_5 = arith.constant 0 : index
      %c0_6 = arith.constant 0 : index
      %15 = vector.load %arg9[%c0_5, %c0_6] : memref<512x128xbf16, #tpu.memory_space<vmem>>, vector<512x128xbf16>
      %cst = arith.constant dense<0.000000e+00> : vector<256x128xf32>
      %16 = tpu.matmul %8, %15, %cst {dimension_numbers = #tpu.dot_dimension_numbers<[1], [0], [0], [1], [0, 0, 1, 1], [], []>} : vector<256x512xbf16>, vector<512x128xbf16>, vector<256x128xf32> -> vector<256x128xf32>
      %c0_7 = arith.constant 0 : index
      %c0_8 = arith.constant 0 : index
      %17 = vector.load %arg6[%c0_7, %c0_8] : memref<1x128xf32, #tpu.memory_space<vmem>>, vector<1x128xf32>
      %18 = vector.broadcast %17 : vector<1x128xf32> to vector<256x128xf32>
      %19 = arith.addf %16, %18 : vector<256x128xf32>
      %c0_9 = arith.constant 0 : index
      %c0_10 = arith.constant 0 : index
      %20 = vector.load %arg7[%c0_9, %c0_10] : memref<256x128xf32, #tpu.memory_space<vmem>>, vector<256x128xf32>
      tpu.vector_store %arg7[%c0_9, %c0_10], %19 {strides = array<i32>} : memref<256x128xf32, #tpu.memory_space<vmem>>, vector<256x128xf32>,
    } else {
    }
    return
  }
  func.func @transform_1(%arg0: i32, %arg1: i32) -> (i32, i32) {
    %c0_i32 = arith.constant 0 : i32
    %c0_i32_0 = arith.constant 0 : i32
    %c0_i32_1 = arith.constant 0 : i32
    return %c0_i32, %c0_i32_0 : i32, i32
  }
  func.func @transform_2(%arg0: i32, %arg1: i32) -> (i32, i32) {
    %c0_i32 = arith.constant 0 : i32
    %c0_i32_0 = arith.constant 0 : i32
    %c0_i32_1 = arith.constant 0 : i32
    return %c0_i32, %c0_i32_0 : i32, i32
  }
  func.func @transform_3(%arg0: i32, %arg1: i32) -> (i32, i32) {
    %c0_i32 = arith.constant 0 : i32
    %c0_i32_0 = arith.constant 0 : i32
    %c0_i32_1 = arith.constant 0 : i32
    return %c0_i32, %c0_i32_0 : i32, i32
  }
  func.func @transform_4(%arg0: i32, %arg1: i32) -> (i32, i32) {
    %c0_i32 = arith.constant 0 : i32
    %c0_i32_0 = arith.constant 0 : i32
    %c0_i32_1 = arith.constant 0 : i32
    return %c0_i32, %c0_i32_0 : i32, i32
  }
  func.func @transform_5(%arg0: i32, %arg1: i32) -> (i32, i32) {
    %c0_i32 = arith.constant 0 : i32
    %c0_i32_0 = arith.constant 0 : i32
    return %arg1, %c0_i32 : i32, i32
  }
}

</mosaic_0001>

<llo_original>
// kernel: gcn_encoder_pallas.1
$region0: #{gcn_encoder_pallas.1}
  #allocation0 [shape = 'u32[]', space=smem, size = 0x4, offset = 0x4, fixed_abs, tag = 'smem constant byte address 0x4 - core index']
  #allocation1 [shape = 'u32[72,128]{1,0:T(1,128)}', space=vmem, size = 0x9000, scoped, tag = 'internal scratch']
  #allocation2 [shape = 'bf16[512,512]{1,0:T(8,128)(2,1)}', space=vmem, size = 0x80000, scoped, tag = 'scratch operand']
  #allocation3 [shape = 'bf16[512,128]{1,0:T(8,128)(2,1)}', space=vmem, size = 0x20000, scoped, tag = 'scratch operand']
  #allocation4 [shape = 's32[1]{0}', space=sflag, size = 0x4, scoped, tag = 'scratch operand']
  #allocation5 [shape = 's32[]', space=sflag, size = 0x4, offset = 0, fixed_abs, tag = 'sflag constant byte address 0x0 - dummy sync flag']
  #allocation6 [shape = 's32[]', space=sflag, size = 0x4, offset = 0, fixed_abs, tag = 'sflag constant byte address 0x0 - dummy sync flag']
  #allocation7 [shape = 'u32[]', space=smem, size = 0x4, offset = 0x44, fixed_abs, tag = 'smem constant byte address 0x44 - assertion arg 0']
  #allocation8 [shape = 'u32[]', space=smem, size = 0x4, offset = 0x48, fixed_abs, tag = 'smem constant byte address 0x48 - assertion arg 1']
  %s0 = inlined_call_operand.hbm [shape: bf16[512,512], index: 0, kind: input, shape index: {}]
  %s1 = inlined_call_operand.vmem [shape: bf16[512,128], index: 1, kind: input, shape index: {}]
  %s2 = inlined_call_operand.vmem [shape: f32[1,128], index: 2, kind: input, shape index: {}]
  %s3 = inlined_call_operand.vmem [shape: bf16[128,128], index: 3, kind: input, shape index: {}]
  %s4 = inlined_call_operand.vmem [shape: f32[1,128], index: 4, kind: input, shape index: {}]
  %s5 = inlined_call_operand.vmem [shape: f32[512,128], index: 5, kind: output, shape index: {}]
  %s6 = sld [smem:[#allocation0]]
  $region65: #{gcn_encoder_pallas.1} parent=0
    _
  %s8 = ssub.s32 1, %s6
  %s9 = scalar_select 0, %s8, %s6
  loop: start=0, step=1, limit=6
  $region2: #{gcn_encoder_pallas.1} parent=0 // loop_pre_header
    _
  $region3: #{gcn_encoder_pallas.1} parent=0 // loop_header
    %s11 = sphi 0, %s15
    %p12 = scmp.ge.s32.totalorder %s11, 6
    %s18 = sphi 0, %s30
    %s19 = sphi 0, %s26
    %s20 = sphi 0, %s18
    %s21 = sphi 0, %s19
    %s22 = sphi 0, %s20
    %s23 = sphi 0, %s21
    %s31 = sphi 0, %s31
    %s33 = sphi 0, %s31
    %s34 = sphi 0, %s33
    %s48 = sphi 0, %s34
    %s52 = sphi 0, %s52
    %s54 = sphi 0, %s52
    %s55 = sphi 0, %s54
    %s69 = sphi 0, %s55
    %s73 = sphi 0, %s73
    %s75 = sphi 0, %s73
    %s76 = sphi 0, %s75
    %s90 = sphi 0, %s76
    %s94 = sphi 0, %s94
    %s96 = sphi 0, %s94
    %s97 = sphi 0, %s96
    %s111 = sphi 0, %s97
    %s117 = sphi 0, %s119
    %s120 = sphi 0, %s117
    %s121 = sphi 0, %s120
    %s137 = sphi 0, %s121
  $region4: #{gcn_encoder_pallas.1} parent=0 // loop_header_branch
    %14 = sbr.rel (%p12) target = $region8
  $region5: #{gcn_encoder_pallas.1} parent=0 // loop_body
    %s16 = ssub.s32 %s11, 1
    %s17 = ssub.s32 %s11, 2
    %s24 = sadd.s32 1, %s19
    %p25 = scmp.ge.s32.totalorder %s24, 2
    %s26 = scalar_select %p25, 0, %s24
    %s27 = sadd.s32 1, %s18
    %s28 = scalar_select %p25, %s27, %s18
    %p29 = scmp.ge.s32.totalorder %s28, 2
    %s30 = scalar_select %p29, 0, %s28
    %s32 = sadd.s32 %s31, 1
    %p35 = scmp.eq.s32.totalorder %s11, 3
    %p36 = scmp.ne.s32.totalorder %s31, %s33
    %p37 = scmp.eq.s32.totalorder %s11, 0
    %p38 = por %p36, %p37
    %p39 = scmp.ne.s32.totalorder %s31, %s33
    %p40 = scmp.eq.s32.totalorder %s16, 3
    %p41 = por %p39, %p40
    %p42 = scmp.ne.s32.totalorder %s33, %s34
    %p43 = scmp.eq.s32.totalorder %s16, 0
    %p44 = por %p42, %p43
    %p45 = scmp.ne.s32.totalorder %s33, %s34
    %p46 = scmp.eq.s32.totalorder %s17, 3
    %p47 = por %p45, %p46
    %p49 = scmp.ne.s32.totalorder %s34, %s48
    %p50 = scmp.eq.s32.totalorder %s17, 0
    %p51 = por %p49, %p50
    %s53 = sadd.s32 %s52, 1
    %p56 = scmp.eq.s32.totalorder %s11, 3
    %p57 = scmp.ne.s32.totalorder %s52, %s54
    %p58 = scmp.eq.s32.totalorder %s11, 0
    %p59 = por %p57, %p58
    %p60 = scmp.ne.s32.totalorder %s52, %s54
    %p61 = scmp.eq.s32.totalorder %s16, 3
    %p62 = por %p60, %p61
    %p63 = scmp.ne.s32.totalorder %s54, %s55
    %p64 = scmp.eq.s32.totalorder %s16, 0
    %p65 = por %p63, %p64
    %p66 = scmp.ne.s32.totalorder %s54, %s55
    %p67 = scmp.eq.s32.totalorder %s17, 3
    %p68 = por %p66, %p67
    %p70 = scmp.ne.s32.totalorder %s55, %s69
    %p71 = scmp.eq.s32.totalorder %s17, 0
    %p72 = por %p70, %p71
    %s74 = sadd.s32 %s73, 1
    %p77 = scmp.eq.s32.totalorder %s11, 3
    %p78 = scmp.ne.s32.totalorder %s73, %s75
    %p79 = scmp.eq.s32.totalorder %s11, 0
    %p80 = por %p78, %p79
    %p81 = scmp.ne.s32.totalorder %s73, %s75
    %p82 = scmp.eq.s32.totalorder %s16, 3
    %p83 = por %p81, %p82
    %p84 = scmp.ne.s32.totalorder %s75, %s76
    %p85 = scmp.eq.s32.totalorder %s16, 0
    %p86 = por %p84, %p85
    %p87 = scmp.ne.s32.totalorder %s75, %s76
    %p88 = scmp.eq.s32.totalorder %s17, 3
    %p89 = por %p87, %p88
    %p91 = scmp.ne.s32.totalorder %s76, %s90
    %p92 = scmp.eq.s32.totalorder %s17, 0
    %p93 = por %p91, %p92
    %s95 = sadd.s32 %s94, 1
    %p98 = scmp.eq.s32.totalorder %s11, 3
    %p99 = scmp.ne.s32.totalorder %s94, %s96
    %p100 = scmp.eq.s32.totalorder %s11, 0
    %p101 = por %p99, %p100
    %p102 = scmp.ne.s32.totalorder %s94, %s96
    %p103 = scmp.eq.s32.totalorder %s16, 3
    %p104 = por %p102, %p103
    %p105 = scmp.ne.s32.totalorder %s96, %s97
    %p106 = scmp.eq.s32.totalorder %s16, 0
    %p107 = por %p105, %p106
    %p108 = scmp.ne.s32.totalorder %s96, %s97
    %p109 = scmp.eq.s32.totalorder %s17, 3
    %p110 = por %p108, %p109
    %p112 = scmp.ne.s32.totalorder %s97, %s111
    %p113 = scmp.eq.s32.totalorder %s17, 0
    %p114 = por %p112, %p113
    %s115 = ssub.s32 %s19, %s26
    %p116 = scmp.eq.s32.totalorder %s115, 0
    %s118 = sadd.s32 %s117, 1
    %s119 = scalar_select %p116, %s117, %s118
    %p122 = pneg %p116
    %p123 = scmp.eq.s32.totalorder %s11, 3
    %p124 = por %p122, %p123
    %p125 = scmp.ne.s32.totalorder %s117, %s120
    %p126 = scmp.eq.s32.totalorder %s11, 0
    %p127 = por %p125, %p126
    %p128 = scmp.ne.s32.totalorder %s117, %s120
    %p129 = scmp.eq.s32.totalorder %s16, 3
    %p130 = por %p128, %p129
    %p131 = scmp.ne.s32.totalorder %s120, %s121
    %p132 = scmp.eq.s32.totalorder %s16, 0
    %p133 = por %p131, %p132
    %p134 = scmp.ne.s32.totalorder %s120, %s121
    %p135 = scmp.eq.s32.totalorder %s17, 3
    %p136 = por %p134, %p135
    %p138 = scmp.ne.s32.totalorder %s121, %s137
    %p139 = scmp.eq.s32.totalorder %s17, 0
    %p140 = por %p138, %p139
    %p141 = scmp.le.s32.totalorder 1, %s11
    %p142 = scmp.lt.s32.totalorder %s11, 5
    %p143 = pnand %p141, %p142
    %p144 = pneg %p143
    // Predicated region
    $region9: #{gcn_encoder_pallas.1} parent=5 // pred_check
      _
    $region10: #{gcn_encoder_pallas.1} parent=5 // pred_check_branch
      %146 = sbr.rel (%p143) target = $region12
    $region11: #{gcn_encoder_pallas.1} parent=5 // pred_region
      %s147 = ssub.s32 %s11, 1
      // Predicated region
      $region13: #{gcn_encoder_pallas.1} parent=11 // pred_check
        %p148 = pneg %p44
      $region14: #{gcn_encoder_pallas.1} parent=11 // pred_check_branch
        %150 = sbr.rel (%p148) target = $region16
      $region15: #{gcn_encoder_pallas.1} parent=11 // pred_region
        _
      $region16: #{gcn_encoder_pallas.1} parent=11 // pred_fallthru
        _
      // Predicated region
      $region17: #{gcn_encoder_pallas.1} parent=11 // pred_check
        %p151 = pneg %p65
      $region18: #{gcn_encoder_pallas.1} parent=11 // pred_check_branch
        %153 = sbr.rel (%p151) target = $region20
      $region19: #{gcn_encoder_pallas.1} parent=11 // pred_region
        _
      $region20: #{gcn_encoder_pallas.1} parent=11 // pred_fallthru
        _
      // Predicated region
      $region21: #{gcn_encoder_pallas.1} parent=11 // pred_check
        %p154 = pneg %p86
      $region22: #{gcn_encoder_pallas.1} parent=11 // pred_check_branch
        %156 = sbr.rel (%p154) target = $region24
      $region23: #{gcn_encoder_pallas.1} parent=11 // pred_region
        _
      $region24: #{gcn_encoder_pallas.1} parent=11 // pred_fallthru
        _
      // Predicated region
      $region25: #{gcn_encoder_pallas.1} parent=11 // pred_check
        %p157 = pneg %p107
      $region26: #{gcn_encoder_pallas.1} parent=11 // pred_check_branch
        %159 = sbr.rel (%p157) target = $region28
      $region27: #{gcn_encoder_pallas.1} parent=11 // pred_region
        _
      $region28: #{gcn_encoder_pallas.1} parent=11 // pred_fallthru
        _
    $region12: #{gcn_encoder_pallas.1} parent=5 // pred_fallthru
      _
    %p160 = scmp.lt.s32.totalorder %s11, 4
    // Predicated region
    $region29: #{gcn_encoder_pallas.1} parent=5 // pred_check
      %p161 = pneg %p160
    $region30: #{gcn_encoder_pallas.1} parent=5 // pred_check_branch
      %163 = sbr.rel (%p161) target = $region32
    $region31: #{gcn_encoder_pallas.1} parent=5 // pred_region
      _
    $region32: #{gcn_encoder_pallas.1} parent=5 // pred_fallthru
      _
    %p164 = scmp.le.s32.totalorder 1, %s11
    %p165 = scmp.lt.s32.totalorder %s11, 5
    %p166 = pnand %p164, %p165
    %p167 = pneg %p166
    // Predicated region
    $region33: #{gcn_encoder_pallas.1} parent=5 // pred_check
      _
    $region34: #{gcn_encoder_pallas.1} parent=5 // pred_check_branch
      %169 = sbr.rel (%p166) target = $region36
    $region35: #{gcn_encoder_pallas.1} parent=5 // pred_region
      %s170 = ssub.s32 %s11, 1
      %p171 = pneg %p44
      %p172 = pneg %p41
      %p173 = pneg %p65
      %p174 = pneg %p62
      %p175 = pneg %p86
      %p176 = pneg %p83
      %p177 = pneg %p107
      %p178 = pneg %p104
      %p179 = pneg %p133
      %p180 = pneg %p130
      %s181 = smul.u32 32, %s21
      %p182 = scmp.lt.s32.totalorder %s181, 63
      %s183 = scalar_select %p182, %s181, 63
      %s184 = smul.addr %s183, 8
      %s185 = scalar_lea.vmem %s5, %s184
      %s186 = smul.u32 32, %s21
      %p187 = scmp.lt.s32.totalorder %s186, 63
      %s188 = scalar_select %p187, %s186, 63
      %s189 = smul.addr %s188, 8
      %s190 = scalar_lea.vmem %s5, %s189
      %s191 = smul.u32 32, %s21
      %p192 = scmp.eq.s32.totalorder %s20, 0
      %p193 = scmp.eq.s32.totalorder %s21, 0
      %p194 = pnand %p192, %p193
      %p195 = pneg %p194
      // Predicated region
      $region37: #{gcn_encoder_pallas.1} parent=35 // pred_check
        _
      $region38: #{gcn_encoder_pallas.1} parent=35 // pred_check_branch
        %197 = sbr.rel (%p194) target = $region40
      $region39: #{gcn_encoder_pallas.1} parent=35 // pred_region
        // Predicated region
        $region41: #{gcn_encoder_pallas.1} parent=39 // pred_check
          _
        $region42: #{gcn_encoder_pallas.1} parent=39 // pred_check_branch
          %199 = sbr.rel target = $region44
        $region43: #{gcn_encoder_pallas.1} parent=39 // pred_region
          %200 = sst [smem:[#allocation7]] [#allocation6]
          %201 = sst [smem:[#allocation8]] [#allocation5]
        $region44: #{gcn_encoder_pallas.1} parent=39 // pred_fallthru
          _
        %203 = shalt.err (0)
        %s205 = sshll.u32 %s0, 4
        %s206 = int_to_ptr.hbm [resolvable:$true] %s205
        %s207 = sshll.u32 [#allocation2], 4
        %s208 = int_to_ptr.vmem [resolvable:$true] %s207
        %210 = dma.hbm_to_vmem [thread:$0]  %s206, 16384, %s208, [#allocation4]
        %s211 = smul.u32 4, 64
        %s212 = smul.u32 %s211, 4
        %s213 = sshll.u32 %s212, 4
        %214 = dma.done [#allocation4], %s213
      $region40: #{gcn_encoder_pallas.1} parent=35 // pred_fallthru
        _
      %s215 = smul.u32 %s21, 256
      %s216 = sshra.s32 %s215, 3
      %s217 = sand.u32 %s215, 7
      %s218 = smul.u32 %s216, 4
      %s219 = smul.addr %s218, 4
      %s220 = scalar_lea.vmem [#allocation2], %s219
      %v221 = vld [vmem:[%s220] sm:$0xff]
      %v222 = vld [vmem:[%s220 + $0x8] sm:$0xff]
      %v223 = vld [vmem:[%s220 + $0x10] sm:$0xff]
      %v224 = vld [vmem:[%s220 + $0x18] sm:$0xff]
      %v225 = vld [vmem:[%s220 + $0x20] sm:$0xff]
      %v226 = vld [vmem:[%s220 + $0x28] sm:$0xff]
      %v227 = vld [vmem:[%s220 + $0x30] sm:$0xff]
      %v228 = vld [vmem:[%s220 + $0x38] sm:$0xff]
      %v229 = vld [vmem:[%s220 + $0x40] sm:$0xff]
      %v230 = vld [vmem:[%s220 + $0x48] sm:$0xff]
      %v231 = vld [vmem:[%s220 + $0x50] sm:$0xff]
      %v232 = vld [vmem:[%s220 + $0x58] sm:$0xff]
      %v233 = vld [vmem:[%s220 + $0x60] sm:$0xff]
      %v234 = vld [vmem:[%s220 + $0x68] sm:$0xff]
      %v235 = vld [vmem:[%s220 + $0x70] sm:$0xff]
      %v236 = vld [vmem:[%s220 + $0x78] sm:$0xff]
      %v237 = vld [vmem:[%s220 + $0x80] sm:$0xff]
      %v238 = vld [vmem:[%s220 + $0x88] sm:$0xff]
      %v239 = vld [vmem:[%s220 + $0x90] sm:$0xff]
      %v240 = vld [vmem:[%s220 + $0x98] sm:$0xff]
      %v241 = vld [vmem:[%s220 + $0xa0] sm:$0xff]
      %v242 = vld [vmem:[%s220 + $0xa8] sm:$0xff]
      %v243 = vld [vmem:[%s220 + $0xb0] sm:$0xff]
      %v244 = vld [vmem:[%s220 + $0xb8] sm:$0xff]
      %v245 = vld [vmem:[%s220 + $0xc0] sm:$0xff]
      %v246 = vld [vmem:[%s220 + $0xc8] sm:$0xff]
      %v247 = vld [vmem:[%s220 + $0xd0] sm:$0xff]
      %v248 = vld [vmem:[%s220 + $0xd8] sm:$0xff]
      %v249 = vld [vmem:[%s220 + $0xe0] sm:$0xff]
      %v250 = vld [vmem:[%s220 + $0xe8] sm:$0xff]
      %v251 = vld [vmem:[%s220 + $0xf0] sm:$0xff]
      %v252 = vld [vmem:[%s220 + $0xf8] sm:$0xff]
      %v253 = vld [vmem:[%s220 + $0x100] sm:$0xff]
      %v254 = vld [vmem:[%s220 + $0x108] sm:$0xff]
      %v255 = vld [vmem:[%s220 + $0x110] sm:$0xff]
      %v256 = vld [vmem:[%s220 + $0x118] sm:$0xff]
      %v257 = vld [vmem:[%s220 + $0x120] sm:$0xff]
      %v258 = vld [vmem:[%s220 + $0x128] sm:$0xff]
      %v259 = vld [vmem:[%s220 + $0x130] sm:$0xff]
      %v260 = vld [vmem:[%s220 + $0x138] sm:$0xff]
      %v261 = vld [vmem:[%s220 + $0x140] sm:$0xff]
      %v262 = vld [vmem:[%s220 + $0x148] sm:$0xff]
      %v263 = vld [vmem:[%s220 + $0x150] sm:$0xff]
      %v264 = vld [vmem:[%s220 + $0x158] sm:$0xff]
      %v265 = vld [vmem:[%s220 + $0x160] sm:$0xff]
      %v266 = vld [vmem:[%s220 + $0x168] sm:$0xff]
      %v267 = vld [vmem:[%s220 + $0x170] sm:$0xff]
      %v268 = vld [vmem:[%s220 + $0x178] sm:$0xff]
      %v269 = vld [vmem:[%s220 + $0x180] sm:$0xff]
      %v270 = vld [vmem:[%s220 + $0x188] sm:$0xff]
      %v271 = vld [vmem:[%s220 + $0x190] sm:$0xff]
      %v272 = vld [vmem:[%s220 + $0x198] sm:$0xff]
      %v273 = vld [vmem:[%s220 + $0x1a0] sm:$0xff]
      %v274 = vld [vmem:[%s220 + $0x1a8] sm:$0xff]
      %v275 = vld [vmem:[%s220 + $0x1b0] sm:$0xff]
      %v276 = vld [vmem:[%s220 + $0x1b8] sm:$0xff]
      %v277 = vld [vmem:[%s220 + $0x1c0] sm:$0xff]
      %v278 = vld [vmem:[%s220 + $0x1c8] sm:$0xff]
      %v279 = vld [vmem:[%s220 + $0x1d0] sm:$0xff]
      %v280 = vld [vmem:[%s220 + $0x1d8] sm:$0xff]
      %v281 = vld [vmem:[%s220 + $0x1e0] sm:$0xff]
      %v282 = vld [vmem:[%s220 + $0x1e8] sm:$0xff]
      %v283 = vld [vmem:[%s220 + $0x1f0] sm:$0xff]
      %v284 = vld [vmem:[%s220 + $0x1f8] sm:$0xff]
      // Predicated region
      $region45: #{gcn_encoder_pallas.1} parent=35 // pred_check
        %p285 = pneg %p192
      $region46: #{gcn_encoder_pallas.1} parent=35 // pred_check_branch
        %287 = sbr.rel (%p285) target = $region48
      $region47: #{gcn_encoder_pallas.1} parent=35 // pred_region
        %v288 = vld [vmem:[%s1] sm:$0xf]
        %v289 = vld [vmem:[%s1 + $0x4] sm:$0xf]
        %v290 = vld [vmem:[%s1 + $0x8] sm:$0xf]
        %v291 = vld [vmem:[%s1 + $0xc] sm:$0xf]
        %v292 = vld [vmem:[%s1 + $0x10] sm:$0xf]
        %v293 = vld [vmem:[%s1 + $0x14] sm:$0xf]
        %v294 = vld [vmem:[%s1 + $0x18] sm:$0xf]
        %v295 = vld [vmem:[%s1 + $0x1c] sm:$0xf]
        %v296 = vld [vmem:[%s1 + $0x20] sm:$0xf]
        %v297 = vld [vmem:[%s1 + $0x24] sm:$0xf]
        %v298 = vld [vmem:[%s1 + $0x28] sm:$0xf]
        %v299 = vld [vmem:[%s1 + $0x2c] sm:$0xf]
        %v300 = vld [vmem:[%s1 + $0x30] sm:$0xf]
        %v301 = vld [vmem:[%s1 + $0x34] sm:$0xf]
        %v302 = vld [vmem:[%s1 + $0x38] sm:$0xf]
        %v303 = vld [vmem:[%s1 + $0x3c] sm:$0xf]
        %v304 = vld [vmem:[%s1 + $0x40] sm:$0xf]
        %v305 = vld [vmem:[%s1 + $0x44] sm:$0xf]
        %v306 = vld [vmem:[%s1 + $0x48] sm:$0xf]
        %v307 = vld [vmem:[%s1 + $0x4c] sm:$0xf]
        %v308 = vld [vmem:[%s1 + $0x50] sm:$0xf]
        %v309 = vld [vmem:[%s1 + $0x54] sm:$0xf]
        %v310 = vld [vmem:[%s1 + $0x58] sm:$0xf]
        %v311 = vld [vmem:[%s1 + $0x5c] sm:$0xf]
        %v312 = vld [vmem:[%s1 + $0x60] sm:$0xf]
        %v313 = vld [vmem:[%s1 + $0x64] sm:$0xf]
        %v314 = vld [vmem:[%s1 + $0x68] sm:$0xf]
        %v315 = vld [vmem:[%s1 + $0x6c] sm:$0xf]
        %v316 = vld [vmem:[%s1 + $0x70] sm:$0xf]
        %v317 = vld [vmem:[%s1 + $0x74] sm:$0xf]
        %v318 = vld [vmem:[%s1 + $0x78] sm:$0xf]
        %v319 = vld [vmem:[%s1 + $0x7c] sm:$0xf]
        %v320 = vld [vmem:[%s1 + $0x80] sm:$0xf]
        %v321 = vld [vmem:[%s1 + $0x84] sm:$0xf]
        %v322 = vld [vmem:[%s1 + $0x88] sm:$0xf]
        %v323 = vld [vmem:[%s1 + $0x8c] sm:$0xf]
        %v324 = vld [vmem:[%s1 + $0x90] sm:$0xf]
        %v325 = vld [vmem:[%s1 + $0x94] sm:$0xf]
        %v326 = vld [vmem:[%s1 + $0x98] sm:$0xf]
        %v327 = vld [vmem:[%s1 + $0x9c] sm:$0xf]
        %v328 = vld [vmem:[%s1 + $0xa0] sm:$0xf]
        %v329 = vld [vmem:[%s1 + $0xa4] sm:$0xf]
        %v330 = vld [vmem:[%s1 + $0xa8] sm:$0xf]
        %v331 = vld [vmem:[%s1 + $0xac] sm:$0xf]
        %v332 = vld [vmem:[%s1 + $0xb0] sm:$0xf]
        %v333 = vld [vmem:[%s1 + $0xb4] sm:$0xf]
        %v334 = vld [vmem:[%s1 + $0xb8] sm:$0xf]
        %v335 = vld [vmem:[%s1 + $0xbc] sm:$0xf]
        %v336 = vld [vmem:[%s1 + $0xc0] sm:$0xf]
        %v337 = vld [vmem:[%s1 + $0xc4] sm:$0xf]
        %v338 = vld [vmem:[%s1 + $0xc8] sm:$0xf]
        %v339 = vld [vmem:[%s1 + $0xcc] sm:$0xf]
        %v340 = vld [vmem:[%s1 + $0xd0] sm:$0xf]
        %v341 = vld [vmem:[%s1 + $0xd4] sm:$0xf]
        %v342 = vld [vmem:[%s1 + $0xd8] sm:$0xf]
        %v343 = vld [vmem:[%s1 + $0xdc] sm:$0xf]
        %v344 = vld [vmem:[%s1 + $0xe0] sm:$0xf]
        %v345 = vld [vmem:[%s1 + $0xe4] sm:$0xf]
        %v346 = vld [vmem:[%s1 + $0xe8] sm:$0xf]
        %v347 = vld [vmem:[%s1 + $0xec] sm:$0xf]
        %v348 = vld [vmem:[%s1 + $0xf0] sm:$0xf]
        %v349 = vld [vmem:[%s1 + $0xf4] sm:$0xf]
        %v350 = vld [vmem:[%s1 + $0xf8] sm:$0xf]
        %v351 = vld [vmem:[%s1 + $0xfc] sm:$0xf]
        %v352 = vld [vmem:[%s2] sm:$0x1]
        %v354 = vperm.slane %v352, 0
        %v420 = vunpack.c.l.b16 %v221
        %v421 = vunpack.c.h.b16 %v221
        %v422 = vunpack.c.l.b16 %v222
        %v423 = vunpack.c.h.b16 %v222
        %v424 = vunpack.c.l.b16 %v223
        %v425 = vunpack.c.h.b16 %v223
        %v426 = vunpack.c.l.b16 %v224
        %v427 = vunpack.c.h.b16 %v224
        %v428 = vunpack.c.l.b16 %v225
        %v429 = vunpack.c.h.b16 %v225
        %v430 = vunpack.c.l.b16 %v226
        %v431 = vunpack.c.h.b16 %v226
        %v432 = vunpack.c.l.b16 %v227
        %v433 = vunpack.c.h.b16 %v227
        %v434 = vunpack.c.l.b16 %v228
        %v435 = vunpack.c.h.b16 %v228
        %v436 = vunpack.c.l.b16 %v229
        %v437 = vunpack.c.h.b16 %v229
        %v438 = vunpack.c.l.b16 %v230
        %v439 = vunpack.c.h.b16 %v230
        %v440 = vunpack.c.l.b16 %v231
        %v441 = vunpack.c.h.b16 %v231
        %v442 = vunpack.c.l.b16 %v232
        %v443 = vunpack.c.h.b16 %v232
        %v444 = vunpack.c.l.b16 %v233
        %v445 = vunpack.c.h.b16 %v233
        %v446 = vunpack.c.l.b16 %v234
        %v447 = vunpack.c.h.b16 %v234
        %v448 = vunpack.c.l.b16 %v235
        %v449 = vunpack.c.h.b16 %v235
        %v450 = vunpack.c.l.b16 %v236
        %v451 = vunpack.c.h.b16 %v236
        %v452 = vunpack.c.l.b16 %v237
        %v453 = vunpack.c.h.b16 %v237
        %v454 = vunpack.c.l.b16 %v238
        %v455 = vunpack.c.h.b16 %v238
        %v456 = vunpack.c.l.b16 %v239
        %v457 = vunpack.c.h.b16 %v239
        %v458 = vunpack.c.l.b16 %v240
        %v459 = vunpack.c.h.b16 %v240
        %v460 = vunpack.c.l.b16 %v241
        %v461 = vunpack.c.h.b16 %v241
        %v462 = vunpack.c.l.b16 %v242
        %v463 = vunpack.c.h.b16 %v242
        %v464 = vunpack.c.l.b16 %v243
        %v465 = vunpack.c.h.b16 %v243
        %v466 = vunpack.c.l.b16 %v244
        %v467 = vunpack.c.h.b16 %v244
        %v468 = vunpack.c.l.b16 %v245
        %v469 = vunpack.c.h.b16 %v245
        %v470 = vunpack.c.l.b16 %v246
        %v471 = vunpack.c.h.b16 %v246
        %v472 = vunpack.c.l.b16 %v247
        %v473 = vunpack.c.h.b16 %v247
        %v474 = vunpack.c.l.b16 %v248
        %v475 = vunpack.c.h.b16 %v248
        %v476 = vunpack.c.l.b16 %v249
        %v477 = vunpack.c.h.b16 %v249
        %v478 = vunpack.c.l.b16 %v250
        %v479 = vunpack.c.h.b16 %v250
        %v480 = vunpack.c.l.b16 %v251
        %v481 = vunpack.c.h.b16 %v251
        %v482 = vunpack.c.l.b16 %v252
        %v483 = vunpack.c.h.b16 %v252
        %v484 = vunpack.c.l.b16 %v253
        %v485 = vunpack.c.h.b16 %v253
        %v486 = vunpack.c.l.b16 %v254
        %v487 = vunpack.c.h.b16 %v254
        %v488 = vunpack.c.l.b16 %v255
        %v489 = vunpack.c.h.b16 %v255
        %v490 = vunpack.c.l.b16 %v256
        %v491 = vunpack.c.h.b16 %v256
        %v492 = vunpack.c.l.b16 %v257
        %v493 = vunpack.c.h.b16 %v257
        %v494 = vunpack.c.l.b16 %v258
        %v495 = vunpack.c.h.b16 %v258
        %v496 = vunpack.c.l.b16 %v259
        %v497 = vunpack.c.h.b16 %v259
        %v498 = vunpack.c.l.b16 %v260
        %v499 = vunpack.c.h.b16 %v260
        %v500 = vunpack.c.l.b16 %v261
        %v501 = vunpack.c.h.b16 %v261
        %v502 = vunpack.c.l.b16 %v262
        %v503 = vunpack.c.h.b16 %v262
        %v504 = vunpack.c.l.b16 %v263
        %v505 = vunpack.c.h.b16 %v263
        %v506 = vunpack.c.l.b16 %v264
        %v507 = vunpack.c.h.b16 %v264
        %v508 = vunpack.c.l.b16 %v265
        %v509 = vunpack.c.h.b16 %v265
        %v510 = vunpack.c.l.b16 %v266
        %v511 = vunpack.c.h.b16 %v266
        %v512 = vunpack.c.l.b16 %v267
        %v513 = vunpack.c.h.b16 %v267
        %v514 = vunpack.c.l.b16 %v268
        %v515 = vunpack.c.h.b16 %v268
        %v516 = vunpack.c.l.b16 %v269
        %v517 = vunpack.c.h.b16 %v269
        %v518 = vunpack.c.l.b16 %v270
        %v519 = vunpack.c.h.b16 %v270
        %v520 = vunpack.c.l.b16 %v271
        %v521 = vunpack.c.h.b16 %v271
        %v522 = vunpack.c.l.b16 %v272
        %v523 = vunpack.c.h.b16 %v272
        %v524 = vunpack.c.l.b16 %v273
        %v525 = vunpack.c.h.b16 %v273
        %v526 = vunpack.c.l.b16 %v274
        %v527 = vunpack.c.h.b16 %v274
        %v528 = vunpack.c.l.b16 %v275
        %v529 = vunpack.c.h.b16 %v275
        %v530 = vunpack.c.l.b16 %v276
        %v531 = vunpack.c.h.b16 %v276
        %v532 = vunpack.c.l.b16 %v277
        %v533 = vunpack.c.h.b16 %v277
        %v534 = vunpack.c.l.b16 %v278
        %v535 = vunpack.c.h.b16 %v278
        %v536 = vunpack.c.l.b16 %v279
        %v537 = vunpack.c.h.b16 %v279
        %v538 = vunpack.c.l.b16 %v280
        %v539 = vunpack.c.h.b16 %v280
        %v540 = vunpack.c.l.b16 %v281
        %v541 = vunpack.c.h.b16 %v281
        %v542 = vunpack.c.l.b16 %v282
        %v543 = vunpack.c.h.b16 %v282
        %v544 = vunpack.c.l.b16 %v283
        %v545 = vunpack.c.h.b16 %v283
        %v546 = vunpack.c.l.b16 %v284
        %v547 = vunpack.c.h.b16 %v284
        %v548 = vpack.c.b16 %v424, %v420
        %v549 = vpack.c.b16 %v425, %v421
        %v550 = vpack.c.b16 %v426, %v422
        %v551 = vpack.c.b16 %v427, %v423
        %v552 = vpack.c.b16 %v432, %v428
        %v553 = vpack.c.b16 %v433, %v429
        %v554 = vpack.c.b16 %v434, %v430
        %v555 = vpack.c.b16 %v435, %v431
        %v556 = vpack.c.b16 %v440, %v436
        %v557 = vpack.c.b16 %v441, %v437
        %v558 = vpack.c.b16 %v442, %v438
        %v559 = vpack.c.b16 %v443, %v439
        %v560 = vpack.c.b16 %v448, %v444
        %v561 = vpack.c.b16 %v449, %v445
        %v562 = vpack.c.b16 %v450, %v446
        %v563 = vpack.c.b16 %v451, %v447
        %v564 = vpack.c.b16 %v456, %v452
        %v565 = vpack.c.b16 %v457, %v453
        %v566 = vpack.c.b16 %v458, %v454
        %v567 = vpack.c.b16 %v459, %v455
        %v568 = vpack.c.b16 %v464, %v460
        %v569 = vpack.c.b16 %v465, %v461
        %v570 = vpack.c.b16 %v466, %v462
        %v571 = vpack.c.b16 %v467, %v463
        %v572 = vpack.c.b16 %v472, %v468
        %v573 = vpack.c.b16 %v473, %v469
        %v574 = vpack.c.b16 %v474, %v470
        %v575 = vpack.c.b16 %v475, %v471
        %v576 = vpack.c.b16 %v480, %v476
        %v577 = vpack.c.b16 %v481, %v477
        %v578 = vpack.c.b16 %v482, %v478
        %v579 = vpack.c.b16 %v483, %v479
        %v580 = vpack.c.b16 %v488, %v484
        %v581 = vpack.c.b16 %v489, %v485
        %v582 = vpack.c.b16 %v490, %v486
        %v583 = vpack.c.b16 %v491, %v487
        %v584 = vpack.c.b16 %v496, %v492
        %v585 = vpack.c.b16 %v497, %v493
        %v586 = vpack.c.b16 %v498, %v494
        %v587 = vpack.c.b16 %v499, %v495
        %v588 = vpack.c.b16 %v504, %v500
        %v589 = vpack.c.b16 %v505, %v501
        %v590 = vpack.c.b16 %v506, %v502
        %v591 = vpack.c.b16 %v507, %v503
        %v592 = vpack.c.b16 %v512, %v508
        %v593 = vpack.c.b16 %v513, %v509
        %v594 = vpack.c.b16 %v514, %v510
        %v595 = vpack.c.b16 %v515, %v511
        %v596 = vpack.c.b16 %v520, %v516
        %v597 = vpack.c.b16 %v521, %v517
        %v598 = vpack.c.b16 %v522, %v518
        %v599 = vpack.c.b16 %v523, %v519
        %v600 = vpack.c.b16 %v528, %v524
        %v601 = vpack.c.b16 %v529, %v525
        %v602 = vpack.c.b16 %v530, %v526
        %v603 = vpack.c.b16 %v531, %v527
        %v604 = vpack.c.b16 %v536, %v532
        %v605 = vpack.c.b16 %v537, %v533
        %v606 = vpack.c.b16 %v538, %v534
        %v607 = vpack.c.b16 %v539, %v535
        %v608 = vpack.c.b16 %v544, %v540
        %v609 = vpack.c.b16 %v545, %v541
        %v610 = vpack.c.b16 %v546, %v542
        %v611 = vpack.c.b16 %v547, %v543
        %v740 = vunpack.c.l.b16 %v288
        %v741 = vunpack.c.l.b16 %v289
        %v742 = vunpack.c.l.b16 %v290
        %v743 = vunpack.c.l.b16 %v291
        %v744 = vunpack.c.l.b16 %v292
        %v745 = vunpack.c.l.b16 %v293
        %v746 = vunpack.c.l.b16 %v294
        %v747 = vunpack.c.l.b16 %v295
        %v748 = vunpack.c.l.b16 %v296
        %v749 = vunpack.c.l.b16 %v297
        %v750 = vunpack.c.l.b16 %v298
        %v751 = vunpack.c.l.b16 %v299
        %v752 = vunpack.c.l.b16 %v300
        %v753 = vunpack.c.l.b16 %v301
        %v754 = vunpack.c.l.b16 %v302
        %v755 = vunpack.c.l.b16 %v303
        %v756 = vunpack.c.l.b16 %v304
        %v757 = vunpack.c.l.b16 %v305
        %v758 = vunpack.c.l.b16 %v306
        %v759 = vunpack.c.l.b16 %v307
        %v760 = vunpack.c.l.b16 %v308
        %v761 = vunpack.c.l.b16 %v309
        %v762 = vunpack.c.l.b16 %v310
        %v763 = vunpack.c.l.b16 %v311
        %v764 = vunpack.c.l.b16 %v312
        %v765 = vunpack.c.l.b16 %v313
        %v766 = vunpack.c.l.b16 %v314
        %v767 = vunpack.c.l.b16 %v315
        %v768 = vunpack.c.l.b16 %v316
        %v769 = vunpack.c.l.b16 %v317
        %v770 = vunpack.c.l.b16 %v318
        %v771 = vunpack.c.l.b16 %v319
        %v772 = vunpack.c.l.b16 %v320
        %v773 = vunpack.c.l.b16 %v321
        %v774 = vunpack.c.l.b16 %v322
        %v775 = vunpack.c.l.b16 %v323
        %v776 = vunpack.c.l.b16 %v324
        %v777 = vunpack.c.l.b16 %v325
        %v778 = vunpack.c.l.b16 %v326
        %v779 = vunpack.c.l.b16 %v327
        %v780 = vunpack.c.l.b16 %v328
        %v781 = vunpack.c.l.b16 %v329
        %v782 = vunpack.c.l.b16 %v330
        %v783 = vunpack.c.l.b16 %v331
        %v784 = vunpack.c.l.b16 %v332
        %v785 = vunpack.c.l.b16 %v333
        %v786 = vunpack.c.l.b16 %v334
        %v787 = vunpack.c.l.b16 %v335
        %v788 = vunpack.c.l.b16 %v336
        %v789 = vunpack.c.l.b16 %v337
        %v790 = vunpack.c.l.b16 %v338
        %v791 = vunpack.c.l.b16 %v339
        %v792 = vunpack.c.l.b16 %v340
        %v793 = vunpack.c.l.b16 %v341
        %v794 = vunpack.c.l.b16 %v342
        %v795 = vunpack.c.l.b16 %v343
        %v796 = vunpack.c.l.b16 %v344
        %v797 = vunpack.c.l.b16 %v345
        %v798 = vunpack.c.l.b16 %v346
        %v799 = vunpack.c.l.b16 %v347
        %v800 = vunpack.c.l.b16 %v348
        %v801 = vunpack.c.l.b16 %v349
        %v802 = vunpack.c.l.b16 %v350
        %v803 = vunpack.c.l.b16 %v351
        %v804 = vpack.c.b16 %v741, %v740
        %v805 = vpack.c.b16 %v743, %v742
        %v806 = vpack.c.b16 %v745, %v744
        %v807 = vpack.c.b16 %v747, %v746
        %v808 = vpack.c.b16 %v749, %v748
        %v809 = vpack.c.b16 %v751, %v750
        %v810 = vpack.c.b16 %v753, %v752
        %v811 = vpack.c.b16 %v755, %v754
        %v812 = vpack.c.b16 %v757, %v756
        %v813 = vpack.c.b16 %v759, %v758
        %v814 = vpack.c.b16 %v761, %v760
        %v815 = vpack.c.b16 %v763, %v762
        %v816 = vpack.c.b16 %v765, %v764
        %v817 = vpack.c.b16 %v767, %v766
        %v818 = vpack.c.b16 %v769, %v768
        %v819 = vpack.c.b16 %v771, %v770
        %v820 = vpack.c.b16 %v773, %v772
        %v821 = vpack.c.b16 %v775, %v774
        %v822 = vpack.c.b16 %v777, %v776
        %v823 = vpack.c.b16 %v779, %v778
        %v824 = vpack.c.b16 %v781, %v780
        %v825 = vpack.c.b16 %v783, %v782
        %v826 = vpack.c.b16 %v785, %v784
        %v827 = vpack.c.b16 %v787, %v786
        %v828 = vpack.c.b16 %v789, %v788
        %v829 = vpack.c.b16 %v791, %v790
        %v830 = vpack.c.b16 %v793, %v792
        %v831 = vpack.c.b16 %v795, %v794
        %v832 = vpack.c.b16 %v797, %v796
        %v833 = vpack.c.b16 %v799, %v798
        %v834 = vpack.c.b16 %v801, %v800
        %v835 = vpack.c.b16 %v803, %v802
        %868 = vmatpush.bf16.msra.mxu0 %v811
        %869 = vmatpush.bf16.msra.mxu0 %v810
        %870 = vmatpush.bf16.msra.mxu0 %v809
        %871 = vmatpush.bf16.msra.mxu0 %v808
        %872 = vmatpush.bf16.msra.mxu0 %v807
        %873 = vmatpush.bf16.msra.mxu0 %v806
        %874 = vmatpush.bf16.msra.mxu0 %v805
        %875 = vmatpush.bf16.msra.mxu0 %v804
        %876 = vmatmul.bf16.gmra.mxu0 %v548
        %v877 = vpop.f32.mrf.mxu0
        %v878 = vadd.f32 %v354, %v877
        %v879 = vpop.f32.mrf.mxu0
        %v880 = vadd.f32 %v354, %v879
        %881 = vmatmul.bf16.gmra.mxu0 %v552
        %v882 = vpop.f32.mrf.mxu0
        %v883 = vadd.f32 %v354, %v882
        %v884 = vpop.f32.mrf.mxu0
        %v885 = vadd.f32 %v354, %v884
        %886 = vmatmul.bf16.gmra.mxu0 %v556
        %v887 = vpop.f32.mrf.mxu0
        %v888 = vadd.f32 %v354, %v887
        %v889 = vpop.f32.mrf.mxu0
        %v890 = vadd.f32 %v354, %v889
        %891 = vmatmul.bf16.gmra.mxu0 %v560
        %v892 = vpop.f32.mrf.mxu0
        %v893 = vadd.f32 %v354, %v892
        %v894 = vpop.f32.mrf.mxu0
        %v895 = vadd.f32 %v354, %v894
        %896 = vmatmul.bf16.gmra.mxu0 %v564
        %v897 = vpop.f32.mrf.mxu0
        %v898 = vadd.f32 %v354, %v897
        %v899 = vpop.f32.mrf.mxu0
        %v900 = vadd.f32 %v354, %v899
        %901 = vmatmul.bf16.gmra.mxu0 %v568
        %v902 = vpop.f32.mrf.mxu0
        %v903 = vadd.f32 %v354, %v902
        %v904 = vpop.f32.mrf.mxu0
        %v905 = vadd.f32 %v354, %v904
        %906 = vmatmul.bf16.gmra.mxu0 %v572
        %v907 = vpop.f32.mrf.mxu0
        %v908 = vadd.f32 %v354, %v907
        %v909 = vpop.f32.mrf.mxu0
        %v910 = vadd.f32 %v354, %v909
        %911 = vmatmul.bf16.gmra.mxu0 %v576
        %v912 = vpop.f32.mrf.mxu0
        %v913 = vadd.f32 %v354, %v912
        %v914 = vpop.f32.mrf.mxu0
        %v915 = vadd.f32 %v354, %v914
        %916 = vmatmul.bf16.gmra.mxu0 %v580
        %v917 = vpop.f32.mrf.mxu0
        %v918 = vadd.f32 %v354, %v917
        %v919 = vpop.f32.mrf.mxu0
        %v920 = vadd.f32 %v354, %v919
        %921 = vmatmul.bf16.gmra.mxu0 %v584
        %v922 = vpop.f32.mrf.mxu0
        %v923 = vadd.f32 %v354, %v922
        %v924 = vpop.f32.mrf.mxu0
        %v925 = vadd.f32 %v354, %v924
        %926 = vmatmul.bf16.gmra.mxu0 %v588
        %v927 = vpop.f32.mrf.mxu0
        %v928 = vadd.f32 %v354, %v927
        %v929 = vpop.f32.mrf.mxu0
        %v930 = vadd.f32 %v354, %v929
        %931 = vmatmul.bf16.gmra.mxu0 %v592
        %v932 = vpop.f32.mrf.mxu0
        %v933 = vadd.f32 %v354, %v932
        %v934 = vpop.f32.mrf.mxu0
        %v935 = vadd.f32 %v354, %v934
        %936 = vmatmul.bf16.gmra.mxu0 %v596
        %v937 = vpop.f32.mrf.mxu0
        %v938 = vadd.f32 %v354, %v937
        %v939 = vpop.f32.mrf.mxu0
        %v940 = vadd.f32 %v354, %v939
        %941 = vmatmul.bf16.gmra.mxu0 %v600
        %v942 = vpop.f32.mrf.mxu0
        %v943 = vadd.f32 %v354, %v942
        %v944 = vpop.f32.mrf.mxu0
        %v945 = vadd.f32 %v354, %v944
        %946 = vmatmul.bf16.gmra.mxu0 %v604
        %v947 = vpop.f32.mrf.mxu0
        %v948 = vadd.f32 %v354, %v947
        %v949 = vpop.f32.mrf.mxu0
        %v950 = vadd.f32 %v354, %v949
        %951 = vmatmul.bf16.gmra.mxu0 %v608
        %v952 = vpop.f32.mrf.mxu0
        %v953 = vadd.f32 %v354, %v952
        %v954 = vpop.f32.mrf.mxu0
        %v955 = vadd.f32 %v354, %v954
        %956 = vdwg.mxu0
        %957 = vmatpush.bf16.msra.mxu0 %v819
        %958 = vmatpush.bf16.msra.mxu0 %v818
        %959 = vmatpush.bf16.msra.mxu0 %v817
        %960 = vmatpush.bf16.msra.mxu0 %v816
        %961 = vmatpush.bf16.msra.mxu0 %v815
        %962 = vmatpush.bf16.msra.mxu0 %v814
        %963 = vmatpush.bf16.msra.mxu0 %v813
        %964 = vmatpush.bf16.msra.mxu0 %v812
        %965 = vmatmul.bf16.gmra.mxu0 %v549
        %v966 = vpop.f32.mrf.mxu0
        %v967 = vadd.f32 %v878, %v966
        %v968 = vpop.f32.mrf.mxu0
        %v969 = vadd.f32 %v880, %v968
        %970 = vmatmul.bf16.gmra.mxu0 %v553
        %v971 = vpop.f32.mrf.mxu0
        %v972 = vadd.f32 %v883, %v971
        %v973 = vpop.f32.mrf.mxu0
        %v974 = vadd.f32 %v885, %v973
        %975 = vmatmul.bf16.gmra.mxu0 %v557
        %v976 = vpop.f32.mrf.mxu0
        %v977 = vadd.f32 %v888, %v976
        %v978 = vpop.f32.mrf.mxu0
        %v979 = vadd.f32 %v890, %v978
        %980 = vmatmul.bf16.gmra.mxu0 %v561
        %v981 = vpop.f32.mrf.mxu0
        %v982 = vadd.f32 %v893, %v981
        %v983 = vpop.f32.mrf.mxu0
        %v984 = vadd.f32 %v895, %v983
        %985 = vmatmul.bf16.gmra.mxu0 %v565
        %v986 = vpop.f32.mrf.mxu0
        %v987 = vadd.f32 %v898, %v986
        %v988 = vpop.f32.mrf.mxu0
        %v989 = vadd.f32 %v900, %v988
        %990 = vmatmul.bf16.gmra.mxu0 %v569
        %v991 = vpop.f32.mrf.mxu0
        %v992 = vadd.f32 %v903, %v991
        %v993 = vpop.f32.mrf.mxu0
        %v994 = vadd.f32 %v905, %v993
        %995 = vmatmul.bf16.gmra.mxu0 %v573
        %v996 = vpop.f32.mrf.mxu0
        %v997 = vadd.f32 %v908, %v996
        %v998 = vpop.f32.mrf.mxu0
        %v999 = vadd.f32 %v910, %v998
        %1000 = vmatmul.bf16.gmra.mxu0 %v577
        %v1001 = vpop.f32.mrf.mxu0
        %v1002 = vadd.f32 %v913, %v1001
        %v1003 = vpop.f32.mrf.mxu0
        %v1004 = vadd.f32 %v915, %v1003
        %1005 = vmatmul.bf16.gmra.mxu0 %v581
        %v1006 = vpop.f32.mrf.mxu0
        %v1007 = vadd.f32 %v918, %v1006
        %v1008 = vpop.f32.mrf.mxu0
        %v1009 = vadd.f32 %v920, %v1008
        %1010 = vmatmul.bf16.gmra.mxu0 %v585
        %v1011 = vpop.f32.mrf.mxu0
        %v1012 = vadd.f32 %v923, %v1011
        %v1013 = vpop.f32.mrf.mxu0
        %v1014 = vadd.f32 %v925, %v1013
        %1015 = vmatmul.bf16.gmra.mxu0 %v589
        %v1016 = vpop.f32.mrf.mxu0
        %v1017 = vadd.f32 %v928, %v1016
        %v1018 = vpop.f32.mrf.mxu0
        %v1019 = vadd.f32 %v930, %v1018
        %1020 = vmatmul.bf16.gmra.mxu0 %v593
        %v1021 = vpop.f32.mrf.mxu0
        %v1022 = vadd.f32 %v933, %v1021
        %v1023 = vpop.f32.mrf.mxu0
        %v1024 = vadd.f32 %v935, %v1023
        %1025 = vmatmul.bf16.gmra.mxu0 %v597
        %v1026 = vpop.f32.mrf.mxu0
        %v1027 = vadd.f32 %v938, %v1026
        %v1028 = vpop.f32.mrf.mxu0
        %v1029 = vadd.f32 %v940, %v1028
        %1030 = vmatmul.bf16.gmra.mxu0 %v601
        %v1031 = vpop.f32.mrf.mxu0
        %v1032 = vadd.f32 %v943, %v1031
        %v1033 = vpop.f32.mrf.mxu0
        %v1034 = vadd.f32 %v945, %v1033
        %1035 = vmatmul.bf16.gmra.mxu0 %v605
        %v1036 = vpop.f32.mrf.mxu0
        %v1037 = vadd.f32 %v948, %v1036
        %v1038 = vpop.f32.mrf.mxu0
        %v1039 = vadd.f32 %v950, %v1038
        %1040 = vmatmul.bf16.gmra.mxu0 %v609
        %v1041 = vpop.f32.mrf.mxu0
        %v1042 = vadd.f32 %v953, %v1041
        %v1043 = vpop.f32.mrf.mxu0
        %v1044 = vadd.f32 %v955, %v1043
        %1045 = vdwg.mxu0
        %1046 = vmatpush.bf16.msra.mxu0 %v827
        %1047 = vmatpush.bf16.msra.mxu0 %v826
        %1048 = vmatpush.bf16.msra.mxu0 %v825
        %1049 = vmatpush.bf16.msra.mxu0 %v824
        %1050 = vmatpush.bf16.msra.mxu0 %v823
        %1051 = vmatpush.bf16.msra.mxu0 %v822
        %1052 = vmatpush.bf16.msra.mxu0 %v821
        %1053 = vmatpush.bf16.msra.mxu0 %v820
        %1054 = vmatmul.bf16.gmra.mxu0 %v550
        %v1055 = vpop.f32.mrf.mxu0
        %v1056 = vadd.f32 %v967, %v1055
        %v1057 = vpop.f32.mrf.mxu0
        %v1058 = vadd.f32 %v969, %v1057
        %1059 = vmatmul.bf16.gmra.mxu0 %v554
        %v1060 = vpop.f32.mrf.mxu0
        %v1061 = vadd.f32 %v972, %v1060
        %v1062 = vpop.f32.mrf.mxu0
        %v1063 = vadd.f32 %v974, %v1062
        %1064 = vmatmul.bf16.gmra.mxu0 %v558
        %v1065 = vpop.f32.mrf.mxu0
        %v1066 = vadd.f32 %v977, %v1065
        %v1067 = vpop.f32.mrf.mxu0
        %v1068 = vadd.f32 %v979, %v1067
        %1069 = vmatmul.bf16.gmra.mxu0 %v562
        %v1070 = vpop.f32.mrf.mxu0
        %v1071 = vadd.f32 %v982, %v1070
        %v1072 = vpop.f32.mrf.mxu0
        %v1073 = vadd.f32 %v984, %v1072
        %1074 = vmatmul.bf16.gmra.mxu0 %v566
        %v1075 = vpop.f32.mrf.mxu0
        %v1076 = vadd.f32 %v987, %v1075
        %v1077 = vpop.f32.mrf.mxu0
        %v1078 = vadd.f32 %v989, %v1077
        %1079 = vmatmul.bf16.gmra.mxu0 %v570
        %v1080 = vpop.f32.mrf.mxu0
        %v1081 = vadd.f32 %v992, %v1080
        %v1082 = vpop.f32.mrf.mxu0
        %v1083 = vadd.f32 %v994, %v1082
        %1084 = vmatmul.bf16.gmra.mxu0 %v574
        %v1085 = vpop.f32.mrf.mxu0
        %v1086 = vadd.f32 %v997, %v1085
        %v1087 = vpop.f32.mrf.mxu0
        %v1088 = vadd.f32 %v999, %v1087
        %1089 = vmatmul.bf16.gmra.mxu0 %v578
        %v1090 = vpop.f32.mrf.mxu0
        %v1091 = vadd.f32 %v1002, %v1090
        %v1092 = vpop.f32.mrf.mxu0
        %v1093 = vadd.f32 %v1004, %v1092
        %1094 = vmatmul.bf16.gmra.mxu0 %v582
        %v1095 = vpop.f32.mrf.mxu0
        %v1096 = vadd.f32 %v1007, %v1095
        %v1097 = vpop.f32.mrf.mxu0
        %v1098 = vadd.f32 %v1009, %v1097
        %1099 = vmatmul.bf16.gmra.mxu0 %v586
        %v1100 = vpop.f32.mrf.mxu0
        %v1101 = vadd.f32 %v1012, %v1100
        %v1102 = vpop.f32.mrf.mxu0
        %v1103 = vadd.f32 %v1014, %v1102
        %1104 = vmatmul.bf16.gmra.mxu0 %v590
        %v1105 = vpop.f32.mrf.mxu0
        %v1106 = vadd.f32 %v1017, %v1105
        %v1107 = vpop.f32.mrf.mxu0
        %v1108 = vadd.f32 %v1019, %v1107
        %1109 = vmatmul.bf16.gmra.mxu0 %v594
        %v1110 = vpop.f32.mrf.mxu0
        %v1111 = vadd.f32 %v1022, %v1110
        %v1112 = vpop.f32.mrf.mxu0
        %v1113 = vadd.f32 %v1024, %v1112
        %1114 = vmatmul.bf16.gmra.mxu0 %v598
        %v1115 = vpop.f32.mrf.mxu0
        %v1116 = vadd.f32 %v1027, %v1115
        %v1117 = vpop.f32.mrf.mxu0
        %v1118 = vadd.f32 %v1029, %v1117
        %1119 = vmatmul.bf16.gmra.mxu0 %v602
        %v1120 = vpop.f32.mrf.mxu0
        %v1121 = vadd.f32 %v1032, %v1120
        %v1122 = vpop.f32.mrf.mxu0
        %v1123 = vadd.f32 %v1034, %v1122
        %1124 = vmatmul.bf16.gmra.mxu0 %v606
        %v1125 = vpop.f32.mrf.mxu0
        %v1126 = vadd.f32 %v1037, %v1125
        %v1127 = vpop.f32.mrf.mxu0
        %v1128 = vadd.f32 %v1039, %v1127
        %1129 = vmatmul.bf16.gmra.mxu0 %v610
        %v1130 = vpop.f32.mrf.mxu0
        %v1131 = vadd.f32 %v1042, %v1130
        %v1132 = vpop.f32.mrf.mxu0
        %v1133 = vadd.f32 %v1044, %v1132
        %1134 = vdwg.mxu0
        %1135 = vmatpush.bf16.msra.mxu0 %v835
        %1136 = vmatpush.bf16.msra.mxu0 %v834
        %1137 = vmatpush.bf16.msra.mxu0 %v833
        %1138 = vmatpush.bf16.msra.mxu0 %v832
        %1139 = vmatpush.bf16.msra.mxu0 %v831
        %1140 = vmatpush.bf16.msra.mxu0 %v830
        %1141 = vmatpush.bf16.msra.mxu0 %v829
        %1142 = vmatpush.bf16.msra.mxu0 %v828
        %1143 = vmatmul.bf16.gmra.mxu0 %v551
        %v1144 = vpop.f32.mrf.mxu0
        %v1145 = vadd.f32 %v1056, %v1144
        %v1146 = vpop.f32.mrf.mxu0
        %v1147 = vadd.f32 %v1058, %v1146
        %1148 = vmatmul.bf16.gmra.mxu0 %v555
        %v1149 = vpop.f32.mrf.mxu0
        %v1150 = vadd.f32 %v1061, %v1149
        %v1151 = vpop.f32.mrf.mxu0
        %v1152 = vadd.f32 %v1063, %v1151
        %1153 = vmatmul.bf16.gmra.mxu0 %v559
        %v1154 = vpop.f32.mrf.mxu0
        %v1155 = vadd.f32 %v1066, %v1154
        %v1156 = vpop.f32.mrf.mxu0
        %v1157 = vadd.f32 %v1068, %v1156
        %1158 = vmatmul.bf16.gmra.mxu0 %v563
        %v1159 = vpop.f32.mrf.mxu0
        %v1160 = vadd.f32 %v1071, %v1159
        %v1161 = vpop.f32.mrf.mxu0
        %v1162 = vadd.f32 %v1073, %v1161
        %1163 = vmatmul.bf16.gmra.mxu0 %v567
        %v1164 = vpop.f32.mrf.mxu0
        %v1165 = vadd.f32 %v1076, %v1164
        %v1166 = vpop.f32.mrf.mxu0
        %v1167 = vadd.f32 %v1078, %v1166
        %1168 = vmatmul.bf16.gmra.mxu0 %v571
        %v1169 = vpop.f32.mrf.mxu0
        %v1170 = vadd.f32 %v1081, %v1169
        %v1171 = vpop.f32.mrf.mxu0
        %v1172 = vadd.f32 %v1083, %v1171
        %1173 = vmatmul.bf16.gmra.mxu0 %v575
        %v1174 = vpop.f32.mrf.mxu0
        %v1175 = vadd.f32 %v1086, %v1174
        %v1176 = vpop.f32.mrf.mxu0
        %v1177 = vadd.f32 %v1088, %v1176
        %1178 = vmatmul.bf16.gmra.mxu0 %v579
        %v1179 = vpop.f32.mrf.mxu0
        %v1180 = vadd.f32 %v1091, %v1179
        %v1181 = vpop.f32.mrf.mxu0
        %v1182 = vadd.f32 %v1093, %v1181
        %1183 = vmatmul.bf16.gmra.mxu0 %v583
        %v1184 = vpop.f32.mrf.mxu0
        %v1185 = vadd.f32 %v1096, %v1184
        %v1186 = vpop.f32.mrf.mxu0
        %v1187 = vadd.f32 %v1098, %v1186
        %1188 = vmatmul.bf16.gmra.mxu0 %v587
        %v1189 = vpop.f32.mrf.mxu0
        %v1190 = vadd.f32 %v1101, %v1189
        %v1191 = vpop.f32.mrf.mxu0
        %v1192 = vadd.f32 %v1103, %v1191
        %1193 = vmatmul.bf16.gmra.mxu0 %v591
        %v1194 = vpop.f32.mrf.mxu0
        %v1195 = vadd.f32 %v1106, %v1194
        %v1196 = vpop.f32.mrf.mxu0
        %v1197 = vadd.f32 %v1108, %v1196
        %1198 = vmatmul.bf16.gmra.mxu0 %v595
        %v1199 = vpop.f32.mrf.mxu0
        %v1200 = vadd.f32 %v1111, %v1199
        %v1201 = vpop.f32.mrf.mxu0
        %v1202 = vadd.f32 %v1113, %v1201
        %1203 = vmatmul.bf16.gmra.mxu0 %v599
        %v1204 = vpop.f32.mrf.mxu0
        %v1205 = vadd.f32 %v1116, %v1204
        %v1206 = vpop.f32.mrf.mxu0
        %v1207 = vadd.f32 %v1118, %v1206
        %1208 = vmatmul.bf16.gmra.mxu0 %v603
        %v1209 = vpop.f32.mrf.mxu0
        %v1210 = vadd.f32 %v1121, %v1209
        %v1211 = vpop.f32.mrf.mxu0
        %v1212 = vadd.f32 %v1123, %v1211
        %1213 = vmatmul.bf16.gmra.mxu0 %v607
        %v1214 = vpop.f32.mrf.mxu0
        %v1215 = vadd.f32 %v1126, %v1214
        %v1216 = vpop.f32.mrf.mxu0
        %v1217 = vadd.f32 %v1128, %v1216
        %1218 = vmatmul.bf16.gmra.mxu0 %v611
        %v1219 = vpop.f32.mrf.mxu0
        %v1220 = vadd.f32 %v1131, %v1219
        %v1221 = vpop.f32.mrf.mxu0
        %v1222 = vadd.f32 %v1133, %v1221
        %1223 = vdwg.mxu0
        %v1224 = vmax.f32 %v1145, 0.0
        %v1225 = vmax.f32 %v1147, 0.0
        %v1226 = vmax.f32 %v1150, 0.0
        %v1227 = vmax.f32 %v1152, 0.0
        %v1228 = vmax.f32 %v1155, 0.0
        %v1229 = vmax.f32 %v1157, 0.0
        %v1230 = vmax.f32 %v1160, 0.0
        %v1231 = vmax.f32 %v1162, 0.0
        %v1232 = vmax.f32 %v1165, 0.0
        %v1233 = vmax.f32 %v1167, 0.0
        %v1234 = vmax.f32 %v1170, 0.0
        %v1235 = vmax.f32 %v1172, 0.0
        %v1236 = vmax.f32 %v1175, 0.0
        %v1237 = vmax.f32 %v1177, 0.0
        %v1238 = vmax.f32 %v1180, 0.0
        %v1239 = vmax.f32 %v1182, 0.0
        %v1240 = vmax.f32 %v1185, 0.0
        %v1241 = vmax.f32 %v1187, 0.0
        %v1242 = vmax.f32 %v1190, 0.0
        %v1243 = vmax.f32 %v1192, 0.0
        %v1244 = vmax.f32 %v1195, 0.0
        %v1245 = vmax.f32 %v1197, 0.0
        %v1246 = vmax.f32 %v1200, 0.0
        %v1247 = vmax.f32 %v1202, 0.0
        %v1248 = vmax.f32 %v1205, 0.0
        %v1249 = vmax.f32 %v1207, 0.0
        %v1250 = vmax.f32 %v1210, 0.0
        %v1251 = vmax.f32 %v1212, 0.0
        %v1252 = vmax.f32 %v1215, 0.0
        %v1253 = vmax.f32 %v1217, 0.0
        %v1254 = vmax.f32 %v1220, 0.0
        %v1255 = vmax.f32 %v1222, 0.0
        %v1256 = vpack.c.bf16 %v1225, %v1224
        %v1257 = vpack.c.bf16 %v1227, %v1226
        %v1258 = vpack.c.bf16 %v1229, %v1228
        %v1259 = vpack.c.bf16 %v1231, %v1230
        %v1260 = vpack.c.bf16 %v1233, %v1232
        %v1261 = vpack.c.bf16 %v1235, %v1234
        %v1262 = vpack.c.bf16 %v1237, %v1236
        %v1263 = vpack.c.bf16 %v1239, %v1238
        %v1264 = vpack.c.bf16 %v1241, %v1240
        %v1265 = vpack.c.bf16 %v1243, %v1242
        %v1266 = vpack.c.bf16 %v1245, %v1244
        %v1267 = vpack.c.bf16 %v1247, %v1246
        %v1268 = vpack.c.bf16 %v1249, %v1248
        %v1269 = vpack.c.bf16 %v1251, %v1250
        %v1270 = vpack.c.bf16 %v1253, %v1252
        %v1271 = vpack.c.bf16 %v1255, %v1254
        %v1272 = vld [vmem:[%s3] sm:$0xf]
        %v1273 = vld [vmem:[%s3 + $0x4] sm:$0xf]
        %v1274 = vld [vmem:[%s3 + $0x8] sm:$0xf]
        %v1275 = vld [vmem:[%s3 + $0xc] sm:$0xf]
        %v1276 = vld [vmem:[%s3 + $0x10] sm:$0xf]
        %v1277 = vld [vmem:[%s3 + $0x14] sm:$0xf]
        %v1278 = vld [vmem:[%s3 + $0x18] sm:$0xf]
        %v1279 = vld [vmem:[%s3 + $0x1c] sm:$0xf]
        %v1280 = vld [vmem:[%s3 + $0x20] sm:$0xf]
        %v1281 = vld [vmem:[%s3 + $0x24] sm:$0xf]
        %v1282 = vld [vmem:[%s3 + $0x28] sm:$0xf]
        %v1283 = vld [vmem:[%s3 + $0x2c] sm:$0xf]
        %v1284 = vld [vmem:[%s3 + $0x30] sm:$0xf]
        %v1285 = vld [vmem:[%s3 + $0x34] sm:$0xf]
        %v1286 = vld [vmem:[%s3 + $0x38] sm:$0xf]
        %v1287 = vld [vmem:[%s3 + $0x3c] sm:$0xf]
        %v1304 = vunpack.c.l.b16 %v1272
        %v1305 = vunpack.c.l.b16 %v1273
        %v1306 = vunpack.c.l.b16 %v1274
        %v1307 = vunpack.c.l.b16 %v1275
        %v1308 = vunpack.c.l.b16 %v1276
        %v1309 = vunpack.c.l.b16 %v1277
        %v1310 = vunpack.c.l.b16 %v1278
        %v1311 = vunpack.c.l.b16 %v1279
        %v1312 = vunpack.c.l.b16 %v1280
        %v1313 = vunpack.c.l.b16 %v1281
        %v1314 = vunpack.c.l.b16 %v1282
        %v1315 = vunpack.c.l.b16 %v1283
        %v1316 = vunpack.c.l.b16 %v1284
        %v1317 = vunpack.c.l.b16 %v1285
        %v1318 = vunpack.c.l.b16 %v1286
        %v1319 = vunpack.c.l.b16 %v1287
        %v1320 = vpack.c.b16 %v1305, %v1304
        %v1321 = vpack.c.b16 %v1307, %v1306
        %v1322 = vpack.c.b16 %v1309, %v1308
        %v1323 = vpack.c.b16 %v1311, %v1310
        %v1324 = vpack.c.b16 %v1313, %v1312
        %v1325 = vpack.c.b16 %v1315, %v1314
        %v1326 = vpack.c.b16 %v1317, %v1316
        %v1327 = vpack.c.b16 %v1319, %v1318
        %1336 = vmatpush.bf16.msra.mxu0 %v1327
        %1337 = vmatpush.bf16.msra.mxu0 %v1326
        %1338 = vmatpush.bf16.msra.mxu0 %v1325
        %1339 = vmatpush.bf16.msra.mxu0 %v1324
        %1340 = vmatpush.bf16.msra.mxu0 %v1323
        %1341 = vmatpush.bf16.msra.mxu0 %v1322
        %1342 = vmatpush.bf16.msra.mxu0 %v1321
        %1343 = vmatpush.bf16.msra.mxu0 %v1320
        %1344 = vmatmul.bf16.gmra.mxu0 %v1256
        %v1345 = vpop.f32.mrf.mxu0
        %v1346 = vadd.f32 0.0, %v1345
        %v1347 = vpop.f32.mrf.mxu0
        %v1348 = vadd.f32 0.0, %v1347
        %1349 = vmatmul.bf16.gmra.mxu0 %v1257
        %v1350 = vpop.f32.mrf.mxu0
        %v1351 = vadd.f32 0.0, %v1350
        %v1352 = vpop.f32.mrf.mxu0
        %v1353 = vadd.f32 0.0, %v1352
        %1354 = vmatmul.bf16.gmra.mxu0 %v1258
        %v1355 = vpop.f32.mrf.mxu0
        %v1356 = vadd.f32 0.0, %v1355
        %v1357 = vpop.f32.mrf.mxu0
        %v1358 = vadd.f32 0.0, %v1357
        %1359 = vmatmul.bf16.gmra.mxu0 %v1259
        %v1360 = vpop.f32.mrf.mxu0
        %v1361 = vadd.f32 0.0, %v1360
        %v1362 = vpop.f32.mrf.mxu0
        %v1363 = vadd.f32 0.0, %v1362
        %1364 = vmatmul.bf16.gmra.mxu0 %v1260
        %v1365 = vpop.f32.mrf.mxu0
        %v1366 = vadd.f32 0.0, %v1365
        %v1367 = vpop.f32.mrf.mxu0
        %v1368 = vadd.f32 0.0, %v1367
        %1369 = vmatmul.bf16.gmra.mxu0 %v1261
        %v1370 = vpop.f32.mrf.mxu0
        %v1371 = vadd.f32 0.0, %v1370
        %v1372 = vpop.f32.mrf.mxu0
        %v1373 = vadd.f32 0.0, %v1372
        %1374 = vmatmul.bf16.gmra.mxu0 %v1262
        %v1375 = vpop.f32.mrf.mxu0
        %v1376 = vadd.f32 0.0, %v1375
        %v1377 = vpop.f32.mrf.mxu0
        %v1378 = vadd.f32 0.0, %v1377
        %1379 = vmatmul.bf16.gmra.mxu0 %v1263
        %v1380 = vpop.f32.mrf.mxu0
        %v1381 = vadd.f32 0.0, %v1380
        %v1382 = vpop.f32.mrf.mxu0
        %v1383 = vadd.f32 0.0, %v1382
        %1384 = vmatmul.bf16.gmra.mxu0 %v1264
        %v1385 = vpop.f32.mrf.mxu0
        %v1386 = vadd.f32 0.0, %v1385
        %v1387 = vpop.f32.mrf.mxu0
        %v1388 = vadd.f32 0.0, %v1387
        %1389 = vmatmul.bf16.gmra.mxu0 %v1265
        %v1390 = vpop.f32.mrf.mxu0
        %v1391 = vadd.f32 0.0, %v1390
        %v1392 = vpop.f32.mrf.mxu0
        %v1393 = vadd.f32 0.0, %v1392
        %1394 = vmatmul.bf16.gmra.mxu0 %v1266
        %v1395 = vpop.f32.mrf.mxu0
        %v1396 = vadd.f32 0.0, %v1395
        %v1397 = vpop.f32.mrf.mxu0
        %v1398 = vadd.f32 0.0, %v1397
        %1399 = vmatmul.bf16.gmra.mxu0 %v1267
        %v1400 = vpop.f32.mrf.mxu0
        %v1401 = vadd.f32 0.0, %v1400
        %v1402 = vpop.f32.mrf.mxu0
        %v1403 = vadd.f32 0.0, %v1402
        %1404 = vmatmul.bf16.gmra.mxu0 %v1268
        %v1405 = vpop.f32.mrf.mxu0
        %v1406 = vadd.f32 0.0, %v1405
        %v1407 = vpop.f32.mrf.mxu0
        %v1408 = vadd.f32 0.0, %v1407
        %1409 = vmatmul.bf16.gmra.mxu0 %v1269
        %v1410 = vpop.f32.mrf.mxu0
        %v1411 = vadd.f32 0.0, %v1410
        %v1412 = vpop.f32.mrf.mxu0
        %v1413 = vadd.f32 0.0, %v1412
        %1414 = vmatmul.bf16.gmra.mxu0 %v1270
        %v1415 = vpop.f32.mrf.mxu0
        %v1416 = vadd.f32 0.0, %v1415
        %v1417 = vpop.f32.mrf.mxu0
        %v1418 = vadd.f32 0.0, %v1417
        %1419 = vmatmul.bf16.gmra.mxu0 %v1271
        %v1420 = vpop.f32.mrf.mxu0
        %v1421 = vadd.f32 0.0, %v1420
        %v1422 = vpop.f32.mrf.mxu0
        %v1423 = vadd.f32 0.0, %v1422
        %1424 = vdwg.mxu0
        %v1425 = vpack.c.bf16 %v1346, %v1346
        %v1426 = vpack.c.bf16 %v1348, %v1348
        %v1427 = vpack.c.bf16 %v1351, %v1351
        %v1428 = vpack.c.bf16 %v1353, %v1353
        %v1429 = vpack.c.bf16 %v1356, %v1356
        %v1430 = vpack.c.bf16 %v1358, %v1358
        %v1431 = vpack.c.bf16 %v1361, %v1361
        %v1432 = vpack.c.bf16 %v1363, %v1363
        %v1433 = vpack.c.bf16 %v1366, %v1366
        %v1434 = vpack.c.bf16 %v1368, %v1368
        %v1435 = vpack.c.bf16 %v1371, %v1371
        %v1436 = vpack.c.bf16 %v1373, %v1373
        %v1437 = vpack.c.bf16 %v1376, %v1376
        %v1438 = vpack.c.bf16 %v1378, %v1378
        %v1439 = vpack.c.bf16 %v1381, %v1381
        %v1440 = vpack.c.bf16 %v1383, %v1383
        %v1441 = vpack.c.bf16 %v1386, %v1386
        %v1442 = vpack.c.bf16 %v1388, %v1388
        %v1443 = vpack.c.bf16 %v1391, %v1391
        %v1444 = vpack.c.bf16 %v1393, %v1393
        %v1445 = vpack.c.bf16 %v1396, %v1396
        %v1446 = vpack.c.bf16 %v1398, %v1398
        %v1447 = vpack.c.bf16 %v1401, %v1401
        %v1448 = vpack.c.bf16 %v1403, %v1403
        %v1449 = vpack.c.bf16 %v1406, %v1406
        %v1450 = vpack.c.bf16 %v1408, %v1408
        %v1451 = vpack.c.bf16 %v1411, %v1411
        %v1452 = vpack.c.bf16 %v1413, %v1413
        %v1453 = vpack.c.bf16 %v1416, %v1416
        %v1454 = vpack.c.bf16 %v1418, %v1418
        %v1455 = vpack.c.bf16 %v1421, %v1421
        %v1456 = vpack.c.bf16 %v1423, %v1423
        %s1457 = smul.addr %s216, 4
        %s1458 = scalar_lea.vmem [#allocation3], %s1457
        %1459 = vst [vmem:[%s1458] sm:$0xf] %v1425
        %1460 = vst [vmem:[%s1458 + $0x4] sm:$0xf] %v1426
        %1461 = vst [vmem:[%s1458 + $0x8] sm:$0xf] %v1427
        %1462 = vst [vmem:[%s1458 + $0xc] sm:$0xf] %v1428
        %1463 = vst [vmem:[%s1458 + $0x10] sm:$0xf] %v1429
        %1464 = vst [vmem:[%s1458 + $0x14] sm:$0xf] %v1430
        %1465 = vst [vmem:[%s1458 + $0x18] sm:$0xf] %v1431
        %1466 = vst [vmem:[%s1458 + $0x1c] sm:$0xf] %v1432
        %1467 = vst [vmem:[%s1458 + $0x20] sm:$0xf] %v1433
        %1468 = vst [vmem:[%s1458 + $0x24] sm:$0xf] %v1434
        %1469 = vst [vmem:[%s1458 + $0x28] sm:$0xf] %v1435
        %1470 = vst [vmem:[%s1458 + $0x2c] sm:$0xf] %v1436
        %1471 = vst [vmem:[%s1458 + $0x30] sm:$0xf] %v1437
        %1472 = vst [vmem:[%s1458 + $0x34] sm:$0xf] %v1438
        %1473 = vst [vmem:[%s1458 + $0x38] sm:$0xf] %v1439
        %1474 = vst [vmem:[%s1458 + $0x3c] sm:$0xf] %v1440
        %1475 = vst [vmem:[%s1458 + $0x40] sm:$0xf] %v1441
        %1476 = vst [vmem:[%s1458 + $0x44] sm:$0xf] %v1442
        %1477 = vst [vmem:[%s1458 + $0x48] sm:$0xf] %v1443
        %1478 = vst [vmem:[%s1458 + $0x4c] sm:$0xf] %v1444
        %1479 = vst [vmem:[%s1458 + $0x50] sm:$0xf] %v1445
        %1480 = vst [vmem:[%s1458 + $0x54] sm:$0xf] %v1446
        %1481 = vst [vmem:[%s1458 + $0x58] sm:$0xf] %v1447
        %1482 = vst [vmem:[%s1458 + $0x5c] sm:$0xf] %v1448
        %1483 = vst [vmem:[%s1458 + $0x60] sm:$0xf] %v1449
        %1484 = vst [vmem:[%s1458 + $0x64] sm:$0xf] %v1450
        %1485 = vst [vmem:[%s1458 + $0x68] sm:$0xf] %v1451
        %1486 = vst [vmem:[%s1458 + $0x6c] sm:$0xf] %v1452
        %1487 = vst [vmem:[%s1458 + $0x70] sm:$0xf] %v1453
        %1488 = vst [vmem:[%s1458 + $0x74] sm:$0xf] %v1454
        %1489 = vst [vmem:[%s1458 + $0x78] sm:$0xf] %v1455
        %1490 = vst [vmem:[%s1458 + $0x7c] sm:$0xf] %v1456
        %1491 = vst [vmem:[%s190] sm:$0xff] 0.0
        %1492 = vst [vmem:[%s190 + $0x8] sm:$0xff] 0.0
        %1493 = vst [vmem:[%s190 + $0x10] sm:$0xff] 0.0
        %1494 = vst [vmem:[%s190 + $0x18] sm:$0xff] 0.0
        %1495 = vst [vmem:[%s190 + $0x20] sm:$0xff] 0.0
        %1496 = vst [vmem:[%s190 + $0x28] sm:$0xff] 0.0
        %1497 = vst [vmem:[%s190 + $0x30] sm:$0xff] 0.0
        %1498 = vst [vmem:[%s190 + $0x38] sm:$0xff] 0.0
        %1499 = vst [vmem:[%s190 + $0x40] sm:$0xff] 0.0
        %1500 = vst [vmem:[%s190 + $0x48] sm:$0xff] 0.0
        %1501 = vst [vmem:[%s190 + $0x50] sm:$0xff] 0.0
        %1502 = vst [vmem:[%s190 + $0x58] sm:$0xff] 0.0
        %1503 = vst [vmem:[%s190 + $0x60] sm:$0xff] 0.0
        %1504 = vst [vmem:[%s190 + $0x68] sm:$0xff] 0.0
        %1505 = vst [vmem:[%s190 + $0x70] sm:$0xff] 0.0
        %1506 = vst [vmem:[%s190 + $0x78] sm:$0xff] 0.0
        %1507 = vst [vmem:[%s190 + $0x80] sm:$0xff] 0.0
        %1508 = vst [vmem:[%s190 + $0x88] sm:$0xff] 0.0
        %1509 = vst [vmem:[%s190 + $0x90] sm:$0xff] 0.0
        %1510 = vst [vmem:[%s190 + $0x98] sm:$0xff] 0.0
        %1511 = vst [vmem:[%s190 + $0xa0] sm:$0xff] 0.0
        %1512 = vst [vmem:[%s190 + $0xa8] sm:$0xff] 0.0
        %1513 = vst [vmem:[%s190 + $0xb0] sm:$0xff] 0.0
        %1514 = vst [vmem:[%s190 + $0xb8] sm:$0xff] 0.0
        %1515 = vst [vmem:[%s190 + $0xc0] sm:$0xff] 0.0
        %1516 = vst [vmem:[%s190 + $0xc8] sm:$0xff] 0.0
        %1517 = vst [vmem:[%s190 + $0xd0] sm:$0xff] 0.0
        %1518 = vst [vmem:[%s190 + $0xd8] sm:$0xff] 0.0
        %1519 = vst [vmem:[%s190 + $0xe0] sm:$0xff] 0.0
        %1520 = vst [vmem:[%s190 + $0xe8] sm:$0xff] 0.0
        %1521 = vst [vmem:[%s190 + $0xf0] sm:$0xff] 0.0
        %1522 = vst [vmem:[%s190 + $0xf8] sm:$0xff] 0.0
      $region48: #{gcn_encoder_pallas.1} parent=35 // pred_fallthru
        _
      %p1523 = scmp.eq.s32.totalorder %s20, 1
      // Predicated region
      $region49: #{gcn_encoder_pallas.1} parent=35 // pred_check
        %p1524 = pneg %p1523
      $region50: #{gcn_encoder_pallas.1} parent=35 // pred_check_branch
        %1526 = sbr.rel (%p1524) target = $region52
      $region51: #{gcn_encoder_pallas.1} parent=35 // pred_region
        %v1527 = vld [vmem:[#allocation3] sm:$0xf]
        %v1528 = vld [vmem:[#allocation3 + $0x4] sm:$0xf]
        %v1529 = vld [vmem:[#allocation3 + $0x8] sm:$0xf]
        %v1530 = vld [vmem:[#allocation3 + $0xc] sm:$0xf]
        %v1531 = vld [vmem:[#allocation3 + $0x10] sm:$0xf]
        %v1532 = vld [vmem:[#allocation3 + $0x14] sm:$0xf]
        %v1533 = vld [vmem:[#allocation3 + $0x18] sm:$0xf]
        %v1534 = vld [vmem:[#allocation3 + $0x1c] sm:$0xf]
        %v1535 = vld [vmem:[#allocation3 + $0x20] sm:$0xf]
        %v1536 = vld [vmem:[#allocation3 + $0x24] sm:$0xf]
        %v1537 = vld [vmem:[#allocation3 + $0x28] sm:$0xf]
        %v1538 = vld [vmem:[#allocation3 + $0x2c] sm:$0xf]
        %v1539 = vld [vmem:[#allocation3 + $0x30] sm:$0xf]
        %v1540 = vld [vmem:[#allocation3 + $0x34] sm:$0xf]
        %v1541 = vld [vmem:[#allocation3 + $0x38] sm:$0xf]
        %v1542 = vld [vmem:[#allocation3 + $0x3c] sm:$0xf]
        %v1543 = vld [vmem:[#allocation3 + $0x40] sm:$0xf]
        %v1544 = vld [vmem:[#allocation3 + $0x44] sm:$0xf]
        %v1545 = vld [vmem:[#allocation3 + $0x48] sm:$0xf]
        %v1546 = vld [vmem:[#allocation3 + $0x4c] sm:$0xf]
        %v1547 = vld [vmem:[#allocation3 + $0x50] sm:$0xf]
        %v1548 = vld [vmem:[#allocation3 + $0x54] sm:$0xf]
        %v1549 = vld [vmem:[#allocation3 + $0x58] sm:$0xf]
        %v1550 = vld [vmem:[#allocation3 + $0x5c] sm:$0xf]
        %v1551 = vld [vmem:[#allocation3 + $0x60] sm:$0xf]
        %v1552 = vld [vmem:[#allocation3 + $0x64] sm:$0xf]
        %v1553 = vld [vmem:[#allocation3 + $0x68] sm:$0xf]
        %v1554 = vld [vmem:[#allocation3 + $0x6c] sm:$0xf]
        %v1555 = vld [vmem:[#allocation3 + $0x70] sm:$0xf]
        %v1556 = vld [vmem:[#allocation3 + $0x74] sm:$0xf]
        %v1557 = vld [vmem:[#allocation3 + $0x78] sm:$0xf]
        %v1558 = vld [vmem:[#allocation3 + $0x7c] sm:$0xf]
        %v1559 = vld [vmem:[#allocation3 + $0x80] sm:$0xf]
        %v1560 = vld [vmem:[#allocation3 + $0x84] sm:$0xf]
        %v1561 = vld [vmem:[#allocation3 + $0x88] sm:$0xf]
        %v1562 = vld [vmem:[#allocation3 + $0x8c] sm:$0xf]
        %v1563 = vld [vmem:[#allocation3 + $0x90] sm:$0xf]
        %v1564 = vld [vmem:[#allocation3 + $0x94] sm:$0xf]
        %v1565 = vld [vmem:[#allocation3 + $0x98] sm:$0xf]
        %v1566 = vld [vmem:[#allocation3 + $0x9c] sm:$0xf]
        %v1567 = vld [vmem:[#allocation3 + $0xa0] sm:$0xf]
        %v1568 = vld [vmem:[#allocation3 + $0xa4] sm:$0xf]
        %v1569 = vld [vmem:[#allocation3 + $0xa8] sm:$0xf]
        %v1570 = vld [vmem:[#allocation3 + $0xac] sm:$0xf]
        %v1571 = vld [vmem:[#allocation3 + $0xb0] sm:$0xf]
        %v1572 = vld [vmem:[#allocation3 + $0xb4] sm:$0xf]
        %v1573 = vld [vmem:[#allocation3 + $0xb8] sm:$0xf]
        %v1574 = vld [vmem:[#allocation3 + $0xbc] sm:$0xf]
        %v1575 = vld [vmem:[#allocation3 + $0xc0] sm:$0xf]
        %v1576 = vld [vmem:[#allocation3 + $0xc4] sm:$0xf]
        %v1577 = vld [vmem:[#allocation3 + $0xc8] sm:$0xf]
        %v1578 = vld [vmem:[#allocation3 + $0xcc] sm:$0xf]
        %v1579 = vld [vmem:[#allocation3 + $0xd0] sm:$0xf]
        %v1580 = vld [vmem:[#allocation3 + $0xd4] sm:$0xf]
        %v1581 = vld [vmem:[#allocation3 + $0xd8] sm:$0xf]
        %v1582 = vld [vmem:[#allocation3 + $0xdc] sm:$0xf]
        %v1583 = vld [vmem:[#allocation3 + $0xe0] sm:$0xf]
        %v1584 = vld [vmem:[#allocation3 + $0xe4] sm:$0xf]
        %v1585 = vld [vmem:[#allocation3 + $0xe8] sm:$0xf]
        %v1586 = vld [vmem:[#allocation3 + $0xec] sm:$0xf]
        %v1587 = vld [vmem:[#allocation3 + $0xf0] sm:$0xf]
        %v1588 = vld [vmem:[#allocation3 + $0xf4] sm:$0xf]
        %v1589 = vld [vmem:[#allocation3 + $0xf8] sm:$0xf]
        %v1590 = vld [vmem:[#allocation3 + $0xfc] sm:$0xf]
        %v1591 = vld [vmem:[%s4] sm:$0x1]
        %v1593 = vperm.slane %v1591, 0
        %v1659 = vunpack.c.l.b16 %v221
        %v1660 = vunpack.c.h.b16 %v221
        %v1661 = vunpack.c.l.b16 %v222
        %v1662 = vunpack.c.h.b16 %v222
        %v1663 = vunpack.c.l.b16 %v223
        %v1664 = vunpack.c.h.b16 %v223
        %v1665 = vunpack.c.l.b16 %v224
        %v1666 = vunpack.c.h.b16 %v224
        %v1667 = vunpack.c.l.b16 %v225
        %v1668 = vunpack.c.h.b16 %v225
        %v1669 = vunpack.c.l.b16 %v226
        %v1670 = vunpack.c.h.b16 %v226
        %v1671 = vunpack.c.l.b16 %v227
        %v1672 = vunpack.c.h.b16 %v227
        %v1673 = vunpack.c.l.b16 %v228
        %v1674 = vunpack.c.h.b16 %v228
        %v1675 = vunpack.c.l.b16 %v229
        %v1676 = vunpack.c.h.b16 %v229
        %v1677 = vunpack.c.l.b16 %v230
        %v1678 = vunpack.c.h.b16 %v230
        %v1679 = vunpack.c.l.b16 %v231
        %v1680 = vunpack.c.h.b16 %v231
        %v1681 = vunpack.c.l.b16 %v232
        %v1682 = vunpack.c.h.b16 %v232
        %v1683 = vunpack.c.l.b16 %v233
        %v1684 = vunpack.c.h.b16 %v233
        %v1685 = vunpack.c.l.b16 %v234
        %v1686 = vunpack.c.h.b16 %v234
        %v1687 = vunpack.c.l.b16 %v235
        %v1688 = vunpack.c.h.b16 %v235
        %v1689 = vunpack.c.l.b16 %v236
        %v1690 = vunpack.c.h.b16 %v236
        %v1691 = vunpack.c.l.b16 %v237
        %v1692 = vunpack.c.h.b16 %v237
        %v1693 = vunpack.c.l.b16 %v238
        %v1694 = vunpack.c.h.b16 %v238
        %v1695 = vunpack.c.l.b16 %v239
        %v1696 = vunpack.c.h.b16 %v239
        %v1697 = vunpack.c.l.b16 %v240
        %v1698 = vunpack.c.h.b16 %v240
        %v1699 = vunpack.c.l.b16 %v241
        %v1700 = vunpack.c.h.b16 %v241
        %v1701 = vunpack.c.l.b16 %v242
        %v1702 = vunpack.c.h.b16 %v242
        %v1703 = vunpack.c.l.b16 %v243
        %v1704 = vunpack.c.h.b16 %v243
        %v1705 = vunpack.c.l.b16 %v244
        %v1706 = vunpack.c.h.b16 %v244
        %v1707 = vunpack.c.l.b16 %v245
        %v1708 = vunpack.c.h.b16 %v245
        %v1709 = vunpack.c.l.b16 %v246
        %v1710 = vunpack.c.h.b16 %v246
        %v1711 = vunpack.c.l.b16 %v247
        %v1712 = vunpack.c.h.b16 %v247
        %v1713 = vunpack.c.l.b16 %v248
        %v1714 = vunpack.c.h.b16 %v248
        %v1715 = vunpack.c.l.b16 %v249
        %v1716 = vunpack.c.h.b16 %v249
        %v1717 = vunpack.c.l.b16 %v250
        %v1718 = vunpack.c.h.b16 %v250
        %v1719 = vunpack.c.l.b16 %v251
        %v1720 = vunpack.c.h.b16 %v251
        %v1721 = vunpack.c.l.b16 %v252
        %v1722 = vunpack.c.h.b16 %v252
        %v1723 = vunpack.c.l.b16 %v253
        %v1724 = vunpack.c.h.b16 %v253
        %v1725 = vunpack.c.l.b16 %v254
        %v1726 = vunpack.c.h.b16 %v254
        %v1727 = vunpack.c.l.b16 %v255
        %v1728 = vunpack.c.h.b16 %v255
        %v1729 = vunpack.c.l.b16 %v256
        %v1730 = vunpack.c.h.b16 %v256
        %v1731 = vunpack.c.l.b16 %v257
        %v1732 = vunpack.c.h.b16 %v257
        %v1733 = vunpack.c.l.b16 %v258
        %v1734 = vunpack.c.h.b16 %v258
        %v1735 = vunpack.c.l.b16 %v259
        %v1736 = vunpack.c.h.b16 %v259
        %v1737 = vunpack.c.l.b16 %v260
        %v1738 = vunpack.c.h.b16 %v260
        %v1739 = vunpack.c.l.b16 %v261
        %v1740 = vunpack.c.h.b16 %v261
        %v1741 = vunpack.c.l.b16 %v262
        %v1742 = vunpack.c.h.b16 %v262
        %v1743 = vunpack.c.l.b16 %v263
        %v1744 = vunpack.c.h.b16 %v263
        %v1745 = vunpack.c.l.b16 %v264
        %v1746 = vunpack.c.h.b16 %v264
        %v1747 = vunpack.c.l.b16 %v265
        %v1748 = vunpack.c.h.b16 %v265
        %v1749 = vunpack.c.l.b16 %v266
        %v1750 = vunpack.c.h.b16 %v266
        %v1751 = vunpack.c.l.b16 %v267
        %v1752 = vunpack.c.h.b16 %v267
        %v1753 = vunpack.c.l.b16 %v268
        %v1754 = vunpack.c.h.b16 %v268
        %v1755 = vunpack.c.l.b16 %v269
        %v1756 = vunpack.c.h.b16 %v269
        %v1757 = vunpack.c.l.b16 %v270
        %v1758 = vunpack.c.h.b16 %v270
        %v1759 = vunpack.c.l.b16 %v271
        %v1760 = vunpack.c.h.b16 %v271
        %v1761 = vunpack.c.l.b16 %v272
        %v1762 = vunpack.c.h.b16 %v272
        %v1763 = vunpack.c.l.b16 %v273
        %v1764 = vunpack.c.h.b16 %v273
        %v1765 = vunpack.c.l.b16 %v274
        %v1766 = vunpack.c.h.b16 %v274
        %v1767 = vunpack.c.l.b16 %v275
        %v1768 = vunpack.c.h.b16 %v275
        %v1769 = vunpack.c.l.b16 %v276
        %v1770 = vunpack.c.h.b16 %v276
        %v1771 = vunpack.c.l.b16 %v277
        %v1772 = vunpack.c.h.b16 %v277
        %v1773 = vunpack.c.l.b16 %v278
        %v1774 = vunpack.c.h.b16 %v278
        %v1775 = vunpack.c.l.b16 %v279
        %v1776 = vunpack.c.h.b16 %v279
        %v1777 = vunpack.c.l.b16 %v280
        %v1778 = vunpack.c.h.b16 %v280
        %v1779 = vunpack.c.l.b16 %v281
        %v1780 = vunpack.c.h.b16 %v281
        %v1781 = vunpack.c.l.b16 %v282
        %v1782 = vunpack.c.h.b16 %v282
        %v1783 = vunpack.c.l.b16 %v283
        %v1784 = vunpack.c.h.b16 %v283
        %v1785 = vunpack.c.l.b16 %v284
        %v1786 = vunpack.c.h.b16 %v284
        %v1787 = vpack.c.b16 %v1663, %v1659
        %v1788 = vpack.c.b16 %v1664, %v1660
        %v1789 = vpack.c.b16 %v1665, %v1661
        %v1790 = vpack.c.b16 %v1666, %v1662
        %v1791 = vpack.c.b16 %v1671, %v1667
        %v1792 = vpack.c.b16 %v1672, %v1668
        %v1793 = vpack.c.b16 %v1673, %v1669
        %v1794 = vpack.c.b16 %v1674, %v1670
        %v1795 = vpack.c.b16 %v1679, %v1675
        %v1796 = vpack.c.b16 %v1680, %v1676
        %v1797 = vpack.c.b16 %v1681, %v1677
        %v1798 = vpack.c.b16 %v1682, %v1678
        %v1799 = vpack.c.b16 %v1687, %v1683
        %v1800 = vpack.c.b16 %v1688, %v1684
        %v1801 = vpack.c.b16 %v1689, %v1685
        %v1802 = vpack.c.b16 %v1690, %v1686
        %v1803 = vpack.c.b16 %v1695, %v1691
        %v1804 = vpack.c.b16 %v1696, %v1692
        %v1805 = vpack.c.b16 %v1697, %v1693
        %v1806 = vpack.c.b16 %v1698, %v1694
        %v1807 = vpack.c.b16 %v1703, %v1699
        %v1808 = vpack.c.b16 %v1704, %v1700
        %v1809 = vpack.c.b16 %v1705, %v1701
        %v1810 = vpack.c.b16 %v1706, %v1702
        %v1811 = vpack.c.b16 %v1711, %v1707
        %v1812 = vpack.c.b16 %v1712, %v1708
        %v1813 = vpack.c.b16 %v1713, %v1709
        %v1814 = vpack.c.b16 %v1714, %v1710
        %v1815 = vpack.c.b16 %v1719, %v1715
        %v1816 = vpack.c.b16 %v1720, %v1716
        %v1817 = vpack.c.b16 %v1721, %v1717
        %v1818 = vpack.c.b16 %v1722, %v1718
        %v1819 = vpack.c.b16 %v1727, %v1723
        %v1820 = vpack.c.b16 %v1728, %v1724
        %v1821 = vpack.c.b16 %v1729, %v1725
        %v1822 = vpack.c.b16 %v1730, %v1726
        %v1823 = vpack.c.b16 %v1735, %v1731
        %v1824 = vpack.c.b16 %v1736, %v1732
        %v1825 = vpack.c.b16 %v1737, %v1733
        %v1826 = vpack.c.b16 %v1738, %v1734
        %v1827 = vpack.c.b16 %v1743, %v1739
        %v1828 = vpack.c.b16 %v1744, %v1740
        %v1829 = vpack.c.b16 %v1745, %v1741
        %v1830 = vpack.c.b16 %v1746, %v1742
        %v1831 = vpack.c.b16 %v1751, %v1747
        %v1832 = vpack.c.b16 %v1752, %v1748
        %v1833 = vpack.c.b16 %v1753, %v1749
        %v1834 = vpack.c.b16 %v1754, %v1750
        %v1835 = vpack.c.b16 %v1759, %v1755
        %v1836 = vpack.c.b16 %v1760, %v1756
        %v1837 = vpack.c.b16 %v1761, %v1757
        %v1838 = vpack.c.b16 %v1762, %v1758
        %v1839 = vpack.c.b16 %v1767, %v1763
        %v1840 = vpack.c.b16 %v1768, %v1764
        %v1841 = vpack.c.b16 %v1769, %v1765
        %v1842 = vpack.c.b16 %v1770, %v1766
        %v1843 = vpack.c.b16 %v1775, %v1771
        %v1844 = vpack.c.b16 %v1776, %v1772
        %v1845 = vpack.c.b16 %v1777, %v1773
        %v1846 = vpack.c.b16 %v1778, %v1774
        %v1847 = vpack.c.b16 %v1783, %v1779
        %v1848 = vpack.c.b16 %v1784, %v1780
        %v1849 = vpack.c.b16 %v1785, %v1781
        %v1850 = vpack.c.b16 %v1786, %v1782
        %v1979 = vunpack.c.l.b16 %v1527
        %v1980 = vunpack.c.l.b16 %v1528
        %v1981 = vunpack.c.l.b16 %v1529
        %v1982 = vunpack.c.l.b16 %v1530
        %v1983 = vunpack.c.l.b16 %v1531
        %v1984 = vunpack.c.l.b16 %v1532
        %v1985 = vunpack.c.l.b16 %v1533
        %v1986 = vunpack.c.l.b16 %v1534
        %v1987 = vunpack.c.l.b16 %v1535
        %v1988 = vunpack.c.l.b16 %v1536
        %v1989 = vunpack.c.l.b16 %v1537
        %v1990 = vunpack.c.l.b16 %v1538
        %v1991 = vunpack.c.l.b16 %v1539
        %v1992 = vunpack.c.l.b16 %v1540
        %v1993 = vunpack.c.l.b16 %v1541
        %v1994 = vunpack.c.l.b16 %v1542
        %v1995 = vunpack.c.l.b16 %v1543
        %v1996 = vunpack.c.l.b16 %v1544
        %v1997 = vunpack.c.l.b16 %v1545
        %v1998 = vunpack.c.l.b16 %v1546
        %v1999 = vunpack.c.l.b16 %v1547
        %v2000 = vunpack.c.l.b16 %v1548
        %v2001 = vunpack.c.l.b16 %v1549
        %v2002 = vunpack.c.l.b16 %v1550
        %v2003 = vunpack.c.l.b16 %v1551
        %v2004 = vunpack.c.l.b16 %v1552
        %v2005 = vunpack.c.l.b16 %v1553
        %v2006 = vunpack.c.l.b16 %v1554
        %v2007 = vunpack.c.l.b16 %v1555
        %v2008 = vunpack.c.l.b16 %v1556
        %v2009 = vunpack.c.l.b16 %v1557
        %v2010 = vunpack.c.l.b16 %v1558
        %v2011 = vunpack.c.l.b16 %v1559
        %v2012 = vunpack.c.l.b16 %v1560
        %v2013 = vunpack.c.l.b16 %v1561
        %v2014 = vunpack.c.l.b16 %v1562
        %v2015 = vunpack.c.l.b16 %v1563
        %v2016 = vunpack.c.l.b16 %v1564
        %v2017 = vunpack.c.l.b16 %v1565
        %v2018 = vunpack.c.l.b16 %v1566
        %v2019 = vunpack.c.l.b16 %v1567
        %v2020 = vunpack.c.l.b16 %v1568
        %v2021 = vunpack.c.l.b16 %v1569
        %v2022 = vunpack.c.l.b16 %v1570
        %v2023 = vunpack.c.l.b16 %v1571
        %v2024 = vunpack.c.l.b16 %v1572
        %v2025 = vunpack.c.l.b16 %v1573
        %v2026 = vunpack.c.l.b16 %v1574
        %v2027 = vunpack.c.l.b16 %v1575
        %v2028 = vunpack.c.l.b16 %v1576
        %v2029 = vunpack.c.l.b16 %v1577
        %v2030 = vunpack.c.l.b16 %v1578
        %v2031 = vunpack.c.l.b16 %v1579
        %v2032 = vunpack.c.l.b16 %v1580
        %v2033 = vunpack.c.l.b16 %v1581
        %v2034 = vunpack.c.l.b16 %v1582
        %v2035 = vunpack.c.l.b16 %v1583
        %v2036 = vunpack.c.l.b16 %v1584
        %v2037 = vunpack.c.l.b16 %v1585
        %v2038 = vunpack.c.l.b16 %v1586
        %v2039 = vunpack.c.l.b16 %v1587
        %v2040 = vunpack.c.l.b16 %v1588
        %v2041 = vunpack.c.l.b16 %v1589
        %v2042 = vunpack.c.l.b16 %v1590
        %v2043 = vpack.c.b16 %v1980, %v1979
        %v2044 = vpack.c.b16 %v1982, %v1981
        %v2045 = vpack.c.b16 %v1984, %v1983
        %v2046 = vpack.c.b16 %v1986, %v1985
        %v2047 = vpack.c.b16 %v1988, %v1987
        %v2048 = vpack.c.b16 %v1990, %v1989
        %v2049 = vpack.c.b16 %v1992, %v1991
        %v2050 = vpack.c.b16 %v1994, %v1993
        %v2051 = vpack.c.b16 %v1996, %v1995
        %v2052 = vpack.c.b16 %v1998, %v1997
        %v2053 = vpack.c.b16 %v2000, %v1999
        %v2054 = vpack.c.b16 %v2002, %v2001
        %v2055 = vpack.c.b16 %v2004, %v2003
        %v2056 = vpack.c.b16 %v2006, %v2005
        %v2057 = vpack.c.b16 %v2008, %v2007
        %v2058 = vpack.c.b16 %v2010, %v2009
        %v2059 = vpack.c.b16 %v2012, %v2011
        %v2060 = vpack.c.b16 %v2014, %v2013
        %v2061 = vpack.c.b16 %v2016, %v2015
        %v2062 = vpack.c.b16 %v2018, %v2017
        %v2063 = vpack.c.b16 %v2020, %v2019
        %v2064 = vpack.c.b16 %v2022, %v2021
        %v2065 = vpack.c.b16 %v2024, %v2023
        %v2066 = vpack.c.b16 %v2026, %v2025
        %v2067 = vpack.c.b16 %v2028, %v2027
        %v2068 = vpack.c.b16 %v2030, %v2029
        %v2069 = vpack.c.b16 %v2032, %v2031
        %v2070 = vpack.c.b16 %v2034, %v2033
        %v2071 = vpack.c.b16 %v2036, %v2035
        %v2072 = vpack.c.b16 %v2038, %v2037
        %v2073 = vpack.c.b16 %v2040, %v2039
        %v2074 = vpack.c.b16 %v2042, %v2041
        %2107 = vmatpush.bf16.msra.mxu0 %v2050
        %2108 = vmatpush.bf16.msra.mxu0 %v2049
        %2109 = vmatpush.bf16.msra.mxu0 %v2048
        %2110 = vmatpush.bf16.msra.mxu0 %v2047
        %2111 = vmatpush.bf16.msra.mxu0 %v2046
        %2112 = vmatpush.bf16.msra.mxu0 %v2045
        %2113 = vmatpush.bf16.msra.mxu0 %v2044
        %2114 = vmatpush.bf16.msra.mxu0 %v2043
        %2115 = vmatmul.bf16.gmra.mxu0 %v1787
        %v2116 = vpop.f32.mrf.mxu0
        %v2117 = vadd.f32 %v1593, %v2116
        %v2118 = vpop.f32.mrf.mxu0
        %v2119 = vadd.f32 %v1593, %v2118
        %2120 = vmatmul.bf16.gmra.mxu0 %v1791
        %v2121 = vpop.f32.mrf.mxu0
        %v2122 = vadd.f32 %v1593, %v2121
        %v2123 = vpop.f32.mrf.mxu0
        %v2124 = vadd.f32 %v1593, %v2123
        %2125 = vmatmul.bf16.gmra.mxu0 %v1795
        %v2126 = vpop.f32.mrf.mxu0
        %v2127 = vadd.f32 %v1593, %v2126
        %v2128 = vpop.f32.mrf.mxu0
        %v2129 = vadd.f32 %v1593, %v2128
        %2130 = vmatmul.bf16.gmra.mxu0 %v1799
        %v2131 = vpop.f32.mrf.mxu0
        %v2132 = vadd.f32 %v1593, %v2131
        %v2133 = vpop.f32.mrf.mxu0
        %v2134 = vadd.f32 %v1593, %v2133
        %2135 = vmatmul.bf16.gmra.mxu0 %v1803
        %v2136 = vpop.f32.mrf.mxu0
        %v2137 = vadd.f32 %v1593, %v2136
        %v2138 = vpop.f32.mrf.mxu0
        %v2139 = vadd.f32 %v1593, %v2138
        %2140 = vmatmul.bf16.gmra.mxu0 %v1807
        %v2141 = vpop.f32.mrf.mxu0
        %v2142 = vadd.f32 %v1593, %v2141
        %v2143 = vpop.f32.mrf.mxu0
        %v2144 = vadd.f32 %v1593, %v2143
        %2145 = vmatmul.bf16.gmra.mxu0 %v1811
        %v2146 = vpop.f32.mrf.mxu0
        %v2147 = vadd.f32 %v1593, %v2146
        %v2148 = vpop.f32.mrf.mxu0
        %v2149 = vadd.f32 %v1593, %v2148
        %2150 = vmatmul.bf16.gmra.mxu0 %v1815
        %v2151 = vpop.f32.mrf.mxu0
        %v2152 = vadd.f32 %v1593, %v2151
        %v2153 = vpop.f32.mrf.mxu0
        %v2154 = vadd.f32 %v1593, %v2153
        %2155 = vmatmul.bf16.gmra.mxu0 %v1819
        %v2156 = vpop.f32.mrf.mxu0
        %v2157 = vadd.f32 %v1593, %v2156
        %v2158 = vpop.f32.mrf.mxu0
        %v2159 = vadd.f32 %v1593, %v2158
        %2160 = vmatmul.bf16.gmra.mxu0 %v1823
        %v2161 = vpop.f32.mrf.mxu0
        %v2162 = vadd.f32 %v1593, %v2161
        %v2163 = vpop.f32.mrf.mxu0
        %v2164 = vadd.f32 %v1593, %v2163
        %2165 = vmatmul.bf16.gmra.mxu0 %v1827
        %v2166 = vpop.f32.mrf.mxu0
        %v2167 = vadd.f32 %v1593, %v2166
        %v2168 = vpop.f32.mrf.mxu0
        %v2169 = vadd.f32 %v1593, %v2168
        %2170 = vmatmul.bf16.gmra.mxu0 %v1831
        %v2171 = vpop.f32.mrf.mxu0
        %v2172 = vadd.f32 %v1593, %v2171
        %v2173 = vpop.f32.mrf.mxu0
        %v2174 = vadd.f32 %v1593, %v2173
        %2175 = vmatmul.bf16.gmra.mxu0 %v1835
        %v2176 = vpop.f32.mrf.mxu0
        %v2177 = vadd.f32 %v1593, %v2176
        %v2178 = vpop.f32.mrf.mxu0
        %v2179 = vadd.f32 %v1593, %v2178
        %2180 = vmatmul.bf16.gmra.mxu0 %v1839
        %v2181 = vpop.f32.mrf.mxu0
        %v2182 = vadd.f32 %v1593, %v2181
        %v2183 = vpop.f32.mrf.mxu0
        %v2184 = vadd.f32 %v1593, %v2183
        %2185 = vmatmul.bf16.gmra.mxu0 %v1843
        %v2186 = vpop.f32.mrf.mxu0
        %v2187 = vadd.f32 %v1593, %v2186
        %v2188 = vpop.f32.mrf.mxu0
        %v2189 = vadd.f32 %v1593, %v2188
        %2190 = vmatmul.bf16.gmra.mxu0 %v1847
        %v2191 = vpop.f32.mrf.mxu0
        %v2192 = vadd.f32 %v1593, %v2191
        %v2193 = vpop.f32.mrf.mxu0
        %v2194 = vadd.f32 %v1593, %v2193
        %2195 = vdwg.mxu0
        %2196 = vmatpush.bf16.msra.mxu0 %v2058
        %2197 = vmatpush.bf16.msra.mxu0 %v2057
        %2198 = vmatpush.bf16.msra.mxu0 %v2056
        %2199 = vmatpush.bf16.msra.mxu0 %v2055
        %2200 = vmatpush.bf16.msra.mxu0 %v2054
        %2201 = vmatpush.bf16.msra.mxu0 %v2053
        %2202 = vmatpush.bf16.msra.mxu0 %v2052
        %2203 = vmatpush.bf16.msra.mxu0 %v2051
        %2204 = vmatmul.bf16.gmra.mxu0 %v1788
        %v2205 = vpop.f32.mrf.mxu0
        %v2206 = vadd.f32 %v2117, %v2205
        %v2207 = vpop.f32.mrf.mxu0
        %v2208 = vadd.f32 %v2119, %v2207
        %2209 = vmatmul.bf16.gmra.mxu0 %v1792
        %v2210 = vpop.f32.mrf.mxu0
        %v2211 = vadd.f32 %v2122, %v2210
        %v2212 = vpop.f32.mrf.mxu0
        %v2213 = vadd.f32 %v2124, %v2212
        %2214 = vmatmul.bf16.gmra.mxu0 %v1796
        %v2215 = vpop.f32.mrf.mxu0
        %v2216 = vadd.f32 %v2127, %v2215
        %v2217 = vpop.f32.mrf.mxu0
        %v2218 = vadd.f32 %v2129, %v2217
        %2219 = vmatmul.bf16.gmra.mxu0 %v1800
        %v2220 = vpop.f32.mrf.mxu0
        %v2221 = vadd.f32 %v2132, %v2220
        %v2222 = vpop.f32.mrf.mxu0
        %v2223 = vadd.f32 %v2134, %v2222
        %2224 = vmatmul.bf16.gmra.mxu0 %v1804
        %v2225 = vpop.f32.mrf.mxu0
        %v2226 = vadd.f32 %v2137, %v2225
        %v2227 = vpop.f32.mrf.mxu0
        %v2228 = vadd.f32 %v2139, %v2227
        %2229 = vmatmul.bf16.gmra.mxu0 %v1808
        %v2230 = vpop.f32.mrf.mxu0
        %v2231 = vadd.f32 %v2142, %v2230
        %v2232 = vpop.f32.mrf.mxu0
        %v2233 = vadd.f32 %v2144, %v2232
        %2234 = vmatmul.bf16.gmra.mxu0 %v1812
        %v2235 = vpop.f32.mrf.mxu0
        %v2236 = vadd.f32 %v2147, %v2235
        %v2237 = vpop.f32.mrf.mxu0
        %v2238 = vadd.f32 %v2149, %v2237
        %2239 = vmatmul.bf16.gmra.mxu0 %v1816
        %v2240 = vpop.f32.mrf.mxu0
        %v2241 = vadd.f32 %v2152, %v2240
        %v2242 = vpop.f32.mrf.mxu0
        %v2243 = vadd.f32 %v2154, %v2242
        %2244 = vmatmul.bf16.gmra.mxu0 %v1820
        %v2245 = vpop.f32.mrf.mxu0
        %v2246 = vadd.f32 %v2157, %v2245
        %v2247 = vpop.f32.mrf.mxu0
        %v2248 = vadd.f32 %v2159, %v2247
        %2249 = vmatmul.bf16.gmra.mxu0 %v1824
        %v2250 = vpop.f32.mrf.mxu0
        %v2251 = vadd.f32 %v2162, %v2250
        %v2252 = vpop.f32.mrf.mxu0
        %v2253 = vadd.f32 %v2164, %v2252
        %2254 = vmatmul.bf16.gmra.mxu0 %v1828
        %v2255 = vpop.f32.mrf.mxu0
        %v2256 = vadd.f32 %v2167, %v2255
        %v2257 = vpop.f32.mrf.mxu0
        %v2258 = vadd.f32 %v2169, %v2257
        %2259 = vmatmul.bf16.gmra.mxu0 %v1832
        %v2260 = vpop.f32.mrf.mxu0
        %v2261 = vadd.f32 %v2172, %v2260
        %v2262 = vpop.f32.mrf.mxu0
        %v2263 = vadd.f32 %v2174, %v2262
        %2264 = vmatmul.bf16.gmra.mxu0 %v1836
        %v2265 = vpop.f32.mrf.mxu0
        %v2266 = vadd.f32 %v2177, %v2265
        %v2267 = vpop.f32.mrf.mxu0
        %v2268 = vadd.f32 %v2179, %v2267
        %2269 = vmatmul.bf16.gmra.mxu0 %v1840
        %v2270 = vpop.f32.mrf.mxu0
        %v2271 = vadd.f32 %v2182, %v2270
        %v2272 = vpop.f32.mrf.mxu0
        %v2273 = vadd.f32 %v2184, %v2272
        %2274 = vmatmul.bf16.gmra.mxu0 %v1844
        %v2275 = vpop.f32.mrf.mxu0
        %v2276 = vadd.f32 %v2187, %v2275
        %v2277 = vpop.f32.mrf.mxu0
        %v2278 = vadd.f32 %v2189, %v2277
        %2279 = vmatmul.bf16.gmra.mxu0 %v1848
        %v2280 = vpop.f32.mrf.mxu0
        %v2281 = vadd.f32 %v2192, %v2280
        %v2282 = vpop.f32.mrf.mxu0
        %v2283 = vadd.f32 %v2194, %v2282
        %2284 = vdwg.mxu0
        %2285 = vmatpush.bf16.msra.mxu0 %v2066
        %2286 = vmatpush.bf16.msra.mxu0 %v2065
        %2287 = vmatpush.bf16.msra.mxu0 %v2064
        %2288 = vmatpush.bf16.msra.mxu0 %v2063
        %2289 = vmatpush.bf16.msra.mxu0 %v2062
        %2290 = vmatpush.bf16.msra.mxu0 %v2061
        %2291 = vmatpush.bf16.msra.mxu0 %v2060
        %2292 = vmatpush.bf16.msra.mxu0 %v2059
        %2293 = vmatmul.bf16.gmra.mxu0 %v1789
        %v2294 = vpop.f32.mrf.mxu0
        %v2295 = vadd.f32 %v2206, %v2294
        %v2296 = vpop.f32.mrf.mxu0
        %v2297 = vadd.f32 %v2208, %v2296
        %2298 = vmatmul.bf16.gmra.mxu0 %v1793
        %v2299 = vpop.f32.mrf.mxu0
        %v2300 = vadd.f32 %v2211, %v2299
        %v2301 = vpop.f32.mrf.mxu0
        %v2302 = vadd.f32 %v2213, %v2301
        %2303 = vmatmul.bf16.gmra.mxu0 %v1797
        %v2304 = vpop.f32.mrf.mxu0
        %v2305 = vadd.f32 %v2216, %v2304
        %v2306 = vpop.f32.mrf.mxu0
        %v2307 = vadd.f32 %v2218, %v2306
        %2308 = vmatmul.bf16.gmra.mxu0 %v1801
        %v2309 = vpop.f32.mrf.mxu0
        %v2310 = vadd.f32 %v2221, %v2309
        %v2311 = vpop.f32.mrf.mxu0
        %v2312 = vadd.f32 %v2223, %v2311
        %2313 = vmatmul.bf16.gmra.mxu0 %v1805
        %v2314 = vpop.f32.mrf.mxu0
        %v2315 = vadd.f32 %v2226, %v2314
        %v2316 = vpop.f32.mrf.mxu0
        %v2317 = vadd.f32 %v2228, %v2316
        %2318 = vmatmul.bf16.gmra.mxu0 %v1809
        %v2319 = vpop.f32.mrf.mxu0
        %v2320 = vadd.f32 %v2231, %v2319
        %v2321 = vpop.f32.mrf.mxu0
        %v2322 = vadd.f32 %v2233, %v2321
        %2323 = vmatmul.bf16.gmra.mxu0 %v1813
        %v2324 = vpop.f32.mrf.mxu0
        %v2325 = vadd.f32 %v2236, %v2324
        %v2326 = vpop.f32.mrf.mxu0
        %v2327 = vadd.f32 %v2238, %v2326
        %2328 = vmatmul.bf16.gmra.mxu0 %v1817
        %v2329 = vpop.f32.mrf.mxu0
        %v2330 = vadd.f32 %v2241, %v2329
        %v2331 = vpop.f32.mrf.mxu0
        %v2332 = vadd.f32 %v2243, %v2331
        %2333 = vmatmul.bf16.gmra.mxu0 %v1821
        %v2334 = vpop.f32.mrf.mxu0
        %v2335 = vadd.f32 %v2246, %v2334
        %v2336 = vpop.f32.mrf.mxu0
        %v2337 = vadd.f32 %v2248, %v2336
        %2338 = vmatmul.bf16.gmra.mxu0 %v1825
        %v2339 = vpop.f32.mrf.mxu0
        %v2340 = vadd.f32 %v2251, %v2339
        %v2341 = vpop.f32.mrf.mxu0
        %v2342 = vadd.f32 %v2253, %v2341
        %2343 = vmatmul.bf16.gmra.mxu0 %v1829
        %v2344 = vpop.f32.mrf.mxu0
        %v2345 = vadd.f32 %v2256, %v2344
        %v2346 = vpop.f32.mrf.mxu0
        %v2347 = vadd.f32 %v2258, %v2346
        %2348 = vmatmul.bf16.gmra.mxu0 %v1833
        %v2349 = vpop.f32.mrf.mxu0
        %v2350 = vadd.f32 %v2261, %v2349
        %v2351 = vpop.f32.mrf.mxu0
        %v2352 = vadd.f32 %v2263, %v2351
        %2353 = vmatmul.bf16.gmra.mxu0 %v1837
        %v2354 = vpop.f32.mrf.mxu0
        %v2355 = vadd.f32 %v2266, %v2354
        %v2356 = vpop.f32.mrf.mxu0
        %v2357 = vadd.f32 %v2268, %v2356
        %2358 = vmatmul.bf16.gmra.mxu0 %v1841
        %v2359 = vpop.f32.mrf.mxu0
        %v2360 = vadd.f32 %v2271, %v2359
        %v2361 = vpop.f32.mrf.mxu0
        %v2362 = vadd.f32 %v2273, %v2361
        %2363 = vmatmul.bf16.gmra.mxu0 %v1845
        %v2364 = vpop.f32.mrf.mxu0
        %v2365 = vadd.f32 %v2276, %v2364
        %v2366 = vpop.f32.mrf.mxu0
        %v2367 = vadd.f32 %v2278, %v2366
        %2368 = vmatmul.bf16.gmra.mxu0 %v1849
        %v2369 = vpop.f32.mrf.mxu0
        %v2370 = vadd.f32 %v2281, %v2369
        %v2371 = vpop.f32.mrf.mxu0
        %v2372 = vadd.f32 %v2283, %v2371
        %2373 = vdwg.mxu0
        %2374 = vmatpush.bf16.msra.mxu0 %v2074
        %2375 = vmatpush.bf16.msra.mxu0 %v2073
        %2376 = vmatpush.bf16.msra.mxu0 %v2072
        %2377 = vmatpush.bf16.msra.mxu0 %v2071
        %2378 = vmatpush.bf16.msra.mxu0 %v2070
        %2379 = vmatpush.bf16.msra.mxu0 %v2069
        %2380 = vmatpush.bf16.msra.mxu0 %v2068
        %2381 = vmatpush.bf16.msra.mxu0 %v2067
        %2382 = vmatmul.bf16.gmra.mxu0 %v1790
        %v2383 = vpop.f32.mrf.mxu0
        %v2384 = vadd.f32 %v2295, %v2383
        %v2385 = vpop.f32.mrf.mxu0
        %v2386 = vadd.f32 %v2297, %v2385
        %2387 = vmatmul.bf16.gmra.mxu0 %v1794
        %v2388 = vpop.f32.mrf.mxu0
        %v2389 = vadd.f32 %v2300, %v2388
        %v2390 = vpop.f32.mrf.mxu0
        %v2391 = vadd.f32 %v2302, %v2390
        %2392 = vmatmul.bf16.gmra.mxu0 %v1798
        %v2393 = vpop.f32.mrf.mxu0
        %v2394 = vadd.f32 %v2305, %v2393
        %v2395 = vpop.f32.mrf.mxu0
        %v2396 = vadd.f32 %v2307, %v2395
        %2397 = vmatmul.bf16.gmra.mxu0 %v1802
        %v2398 = vpop.f32.mrf.mxu0
        %v2399 = vadd.f32 %v2310, %v2398
        %v2400 = vpop.f32.mrf.mxu0
        %v2401 = vadd.f32 %v2312, %v2400
        %2402 = vmatmul.bf16.gmra.mxu0 %v1806
        %v2403 = vpop.f32.mrf.mxu0
        %v2404 = vadd.f32 %v2315, %v2403
        %v2405 = vpop.f32.mrf.mxu0
        %v2406 = vadd.f32 %v2317, %v2405
        %2407 = vmatmul.bf16.gmra.mxu0 %v1810
        %v2408 = vpop.f32.mrf.mxu0
        %v2409 = vadd.f32 %v2320, %v2408
        %v2410 = vpop.f32.mrf.mxu0
        %v2411 = vadd.f32 %v2322, %v2410
        %2412 = vmatmul.bf16.gmra.mxu0 %v1814
        %v2413 = vpop.f32.mrf.mxu0
        %v2414 = vadd.f32 %v2325, %v2413
        %v2415 = vpop.f32.mrf.mxu0
        %v2416 = vadd.f32 %v2327, %v2415
        %2417 = vmatmul.bf16.gmra.mxu0 %v1818
        %v2418 = vpop.f32.mrf.mxu0
        %v2419 = vadd.f32 %v2330, %v2418
        %v2420 = vpop.f32.mrf.mxu0
        %v2421 = vadd.f32 %v2332, %v2420
        %2422 = vmatmul.bf16.gmra.mxu0 %v1822
        %v2423 = vpop.f32.mrf.mxu0
        %v2424 = vadd.f32 %v2335, %v2423
        %v2425 = vpop.f32.mrf.mxu0
        %v2426 = vadd.f32 %v2337, %v2425
        %2427 = vmatmul.bf16.gmra.mxu0 %v1826
        %v2428 = vpop.f32.mrf.mxu0
        %v2429 = vadd.f32 %v2340, %v2428
        %v2430 = vpop.f32.mrf.mxu0
        %v2431 = vadd.f32 %v2342, %v2430
        %2432 = vmatmul.bf16.gmra.mxu0 %v1830
        %v2433 = vpop.f32.mrf.mxu0
        %v2434 = vadd.f32 %v2345, %v2433
        %v2435 = vpop.f32.mrf.mxu0
        %v2436 = vadd.f32 %v2347, %v2435
        %2437 = vmatmul.bf16.gmra.mxu0 %v1834
        %v2438 = vpop.f32.mrf.mxu0
        %v2439 = vadd.f32 %v2350, %v2438
        %v2440 = vpop.f32.mrf.mxu0
        %v2441 = vadd.f32 %v2352, %v2440
        %2442 = vmatmul.bf16.gmra.mxu0 %v1838
        %v2443 = vpop.f32.mrf.mxu0
        %v2444 = vadd.f32 %v2355, %v2443
        %v2445 = vpop.f32.mrf.mxu0
        %v2446 = vadd.f32 %v2357, %v2445
        %2447 = vmatmul.bf16.gmra.mxu0 %v1842
        %v2448 = vpop.f32.mrf.mxu0
        %v2449 = vadd.f32 %v2360, %v2448
        %v2450 = vpop.f32.mrf.mxu0
        %v2451 = vadd.f32 %v2362, %v2450
        %2452 = vmatmul.bf16.gmra.mxu0 %v1846
        %v2453 = vpop.f32.mrf.mxu0
        %v2454 = vadd.f32 %v2365, %v2453
        %v2455 = vpop.f32.mrf.mxu0
        %v2456 = vadd.f32 %v2367, %v2455
        %2457 = vmatmul.bf16.gmra.mxu0 %v1850
        %v2458 = vpop.f32.mrf.mxu0
        %v2459 = vadd.f32 %v2370, %v2458
        %v2460 = vpop.f32.mrf.mxu0
        %v2461 = vadd.f32 %v2372, %v2460
        %2462 = vdwg.mxu0
        %2463 = vst [vmem:[%s190] sm:$0xff] %v2384
        %2464 = vst [vmem:[%s190 + $0x8] sm:$0xff] %v2386
        %2465 = vst [vmem:[%s190 + $0x10] sm:$0xff] %v2389
        %2466 = vst [vmem:[%s190 + $0x18] sm:$0xff] %v2391
        %2467 = vst [vmem:[%s190 + $0x20] sm:$0xff] %v2394
        %2468 = vst [vmem:[%s190 + $0x28] sm:$0xff] %v2396
        %2469 = vst [vmem:[%s190 + $0x30] sm:$0xff] %v2399
        %2470 = vst [vmem:[%s190 + $0x38] sm:$0xff] %v2401
        %2471 = vst [vmem:[%s190 + $0x40] sm:$0xff] %v2404
        %2472 = vst [vmem:[%s190 + $0x48] sm:$0xff] %v2406
        %2473 = vst [vmem:[%s190 + $0x50] sm:$0xff] %v2409
        %2474 = vst [vmem:[%s190 + $0x58] sm:$0xff] %v2411
        %2475 = vst [vmem:[%s190 + $0x60] sm:$0xff] %v2414
        %2476 = vst [vmem:[%s190 + $0x68] sm:$0xff] %v2416
        %2477 = vst [vmem:[%s190 + $0x70] sm:$0xff] %v2419
        %2478 = vst [vmem:[%s190 + $0x78] sm:$0xff] %v2421
        %2479 = vst [vmem:[%s190 + $0x80] sm:$0xff] %v2424
        %2480 = vst [vmem:[%s190 + $0x88] sm:$0xff] %v2426
        %2481 = vst [vmem:[%s190 + $0x90] sm:$0xff] %v2429
        %2482 = vst [vmem:[%s190 + $0x98] sm:$0xff] %v2431
        %2483 = vst [vmem:[%s190 + $0xa0] sm:$0xff] %v2434
        %2484 = vst [vmem:[%s190 + $0xa8] sm:$0xff] %v2436
        %2485 = vst [vmem:[%s190 + $0xb0] sm:$0xff] %v2439
        %2486 = vst [vmem:[%s190 + $0xb8] sm:$0xff] %v2441
        %2487 = vst [vmem:[%s190 + $0xc0] sm:$0xff] %v2444
        %2488 = vst [vmem:[%s190 + $0xc8] sm:$0xff] %v2446
        %2489 = vst [vmem:[%s190 + $0xd0] sm:$0xff] %v2449
        %2490 = vst [vmem:[%s190 + $0xd8] sm:$0xff] %v2451
        %2491 = vst [vmem:[%s190 + $0xe0] sm:$0xff] %v2454
        %2492 = vst [vmem:[%s190 + $0xe8] sm:$0xff] %v2456
        %2493 = vst [vmem:[%s190 + $0xf0] sm:$0xff] %v2459
        %2494 = vst [vmem:[%s190 + $0xf8] sm:$0xff] %v2461
      $region52: #{gcn_encoder_pallas.1} parent=35 // pred_fallthru
        _
      %s2495 = smul.u32 32, %s21
      %p2496 = scmp.lt.s32.totalorder %s2495, 63
      %s2497 = scalar_select %p2496, %s2495, 63
      %s2498 = smul.addr %s2497, 8
      %s2499 = scalar_lea.vmem %s5, %s2498
      // Predicated region
      $region53: #{gcn_encoder_pallas.1} parent=35 // pred_check
        %p2500 = pneg %p130
      $region54: #{gcn_encoder_pallas.1} parent=35 // pred_check_branch
        %2502 = sbr.rel (%p2500) target = $region56
      $region55: #{gcn_encoder_pallas.1} parent=35 // pred_region
        %s2503 = smul.u32 32, %s21
      $region56: #{gcn_encoder_pallas.1} parent=35 // pred_fallthru
        _
    $region36: #{gcn_encoder_pallas.1} parent=5 // pred_fallthru
      _
    %p2504 = scmp.le.s32.totalorder 2, %s11
    // Predicated region
    $region57: #{gcn_encoder_pallas.1} parent=5 // pred_check
      %p2505 = pneg %p2504
    $region58: #{gcn_encoder_pallas.1} parent=5 // pred_check_branch
      %2507 = sbr.rel (%p2505) target = $region60
    $region59: #{gcn_encoder_pallas.1} parent=5 // pred_region
      %s2508 = ssub.s32 %s11, 2
      // Predicated region
      $region61: #{gcn_encoder_pallas.1} parent=59 // pred_check
        %p2509 = pneg %p136
      $region62: #{gcn_encoder_pallas.1} parent=59 // pred_check_branch
        %2511 = sbr.rel (%p2509) target = $region64
      $region63: #{gcn_encoder_pallas.1} parent=59 // pred_region
        %s2512 = smul.u32 32, %s23
        %p2513 = scmp.lt.s32.totalorder %s2512, 63
        %s2514 = scalar_select %p2513, %s2512, 63
        %s2515 = smul.addr %s2514, 8
        %s2516 = scalar_lea.vmem %s5, %s2515
      $region64: #{gcn_encoder_pallas.1} parent=59 // pred_fallthru
        _
    $region60: #{gcn_encoder_pallas.1} parent=5 // pred_fallthru
      _
  $region6: #{gcn_encoder_pallas.1} parent=0 // loop_footer
    %s15 = sadd.s32 1, %s11
  $region7: #{gcn_encoder_pallas.1} parent=0 // loop_footer_branch
    %10 = sbr.rel target = $region3
  $region8: #{gcn_encoder_pallas.1} parent=0 // loop_exit
    _
  %2517 = vsyncmov [#allocation4]
  %s2518 = vpop.sfrf %2517
  %p2519 = scmp.eq.s32.totalorder %s2518, 0
  %p2520 = pneg %p2519
  %2522 = shalt.err (%p2520)

</llo_original>
